<compile_context>
chip_gen: v5e
topology: v5e:2x2
jax: 0.10.0
libtpu: 0.0.40
codegen_flags: <defaults>
</compile_context>

<pallas_src>
import jax
import jax.numpy as jnp
from jax.experimental import pallas as pl
from jax.experimental.pallas import tpu as pltpu

HIDDEN = 32
INPUT = 10
LAYERS = 2  # hard-coded two-layer stack inside the kernel


def lstm_kernel(x_ref, wih0_ref, whh0_ref, b0_ref, wih1_ref, whh1_ref, b1_ref,
                out_ref,
                xp_s, h0seq_s):
    T, Bp, H = out_ref.shape
    G = 4 * H

    # Lane mask selecting the tanh ("g") gate band [2H, 3H); hoisted out of the
    # recurrence loops (JAX does not CSE broadcast_in_dim).
    lane = jax.lax.broadcasted_iota(jnp.int32, (Bp, G), 1)
    g_band = (lane >= 2 * H) & (lane < 3 * H)

    def gate_combine(gates, c_prev):
        # Full-width EUP ops + one select instead of four 32-lane slices.
        sig = jax.nn.sigmoid(gates)
        th = jnp.tanh(gates)
        act = jnp.where(g_band, th, sig)
        i = act[:, 0 * H:1 * H]
        f = act[:, 1 * H:2 * H]
        g = act[:, 2 * H:3 * H]
        o = act[:, 3 * H:4 * H]
        c = f * c_prev + i * g
        h = o * jnp.tanh(c)
        return h, c

    zeros = jnp.zeros((Bp, H), jnp.float32)  # h0 = c0 = 0 (matches torch.zeros)

    # ---------------- layer 0 ----------------
    # Batched input projection: one (T*Bp, I) x (I, 4H) GEMM, bias folded in.
    xp_s[...] = (jnp.dot(x_ref[...], wih0_ref[...],
                         preferred_element_type=jnp.float32) + b0_ref[...])

    whh0 = whh0_ref[...]

    def body0(t, carry):
        h_prev, c_prev = carry
        off = pl.multiple_of(t * Bp, 8)
        gates = xp_s[pl.ds(off, Bp), :] + jnp.dot(
            h_prev, whh0, preferred_element_type=jnp.float32)
        h, c = gate_combine(gates, c_prev)
        h0seq_s[pl.ds(off, Bp), :] = h
        return h, c

    jax.lax.fori_loop(0, T, body0, (zeros, zeros), unroll=True)

    # ---------------- layer 1 ----------------
    # Batched input projection over the whole layer-0 hidden sequence.
    xp_s[...] = (jnp.dot(h0seq_s[...], wih1_ref[...],
                         preferred_element_type=jnp.float32) + b1_ref[...])

    whh1 = whh1_ref[...]

    def body1(t, carry):
        h_prev, c_prev = carry
        off = pl.multiple_of(t * Bp, 8)
        gates = xp_s[pl.ds(off, Bp), :] + jnp.dot(
            h_prev, whh1, preferred_element_type=jnp.float32)
        h, c = gate_combine(gates, c_prev)
        out_ref[t] = h.astype(out_ref.dtype)
        return h, c

    jax.lax.fori_loop(0, T, body1, (zeros, zeros), unroll=True)


def lstm_forward(x, params):
    """x: (B, T, INPUT) float32 -> out: (B, T, HIDDEN) float32."""
    B, T, I = x.shape
    H = HIDDEN

    # Pad batch to a multiple of 8 sublanes (free on MXU/vregs) so every
    # per-timestep window of the flat (T*Bp, .) scratches is 8-aligned.
    Bp = max(8, ((B + 7) // 8) * 8)
    x_tm = jnp.transpose(x, (1, 0, 2))                       # (T, B, I)
    x_pad = jnp.zeros((T, Bp, I), x.dtype).at[:, :B, :].set(x_tm)
    x_flat = x_pad.reshape(T * Bp, I)                        # (T*Bp, I)

    wih0, whh0, b0, wih1, whh1, b1 = params

    full = lambda shape: pl.BlockSpec(shape, lambda i: tuple(0 for _ in shape))

    out_tm = pl.pallas_call(
        lstm_kernel,
        out_shape=jax.ShapeDtypeStruct((T, Bp, H), jnp.float32),
        grid_spec=pltpu.PrefetchScalarGridSpec(
            num_scalar_prefetch=0,
            grid=(1,),                      # whole recurrence inside the kernel
            in_specs=[
                full((T * Bp, I)),          # x (time-major, batch-padded, flat)
                full((I, 4 * H)),           # w_ih layer 0  (pre-transposed)
                full((H, 4 * H)),           # w_hh layer 0
                full((1, 4 * H)),           # bias layer 0  (b_ih + b_hh)
                full((H, 4 * H)),           # w_ih layer 1
                full((H, 4 * H)),           # w_hh layer 1
                full((1, 4 * H)),           # bias layer 1
            ],
            out_specs=full((T, Bp, H)),
            scratch_shapes=[
                pltpu.VMEM((T * Bp, 4 * H), jnp.float32),  # gate projections (reused per layer)
                pltpu.VMEM((T * Bp, H), jnp.float32),      # layer-0 hidden sequence
            ],
        ),
        compiler_params=pltpu.CompilerParams(
            dimension_semantics=("arbitrary",),
        ),
    )(x_flat, wih0, whh0, b0, wih1, whh1, b1)

    # Drop batch padding, back to batch_first (B, T, H).
    return jnp.transpose(out_tm[:, :B, :], (1, 0, 2))


def init_params(key):
    """Deterministic init mimicking PyTorch LSTM param shapes.

    PyTorch stores weight_ih_l{k}: (4H, in), weight_hh_l{k}: (4H, H),
    bias_ih/bias_hh: (4H,). We pre-transpose weights to (in, 4H)/(H, 4H)
    and fold the two biases into one (1, 4H) row for the kernel.
    """
    H, I = HIDDEN, INPUT
    bound = 1.0 / jnp.sqrt(H)
    keys = jax.random.split(key, 8)
    u = lambda k, shape: jax.random.uniform(k, shape, jnp.float32, -bound, bound)

    wih0 = u(keys[0], (4 * H, I)).T          # (I, 4H)
    whh0 = u(keys[1], (4 * H, H)).T          # (H, 4H)
    b0 = (u(keys[2], (4 * H,)) + u(keys[3], (4 * H,))).reshape(1, 4 * H)

    wih1 = u(keys[4], (4 * H, H)).T          # (H, 4H)
    whh1 = u(keys[5], (4 * H, H)).T          # (H, 4H)
    b1 = (u(keys[6], (4 * H,)) + u(keys[7], (4 * H,))).reshape(1, 4 * H)

    return wih0, whh0, b0, wih1, whh1, b1


def lstm_reference(x, params):
    """Pure-JAX reference (lax.scan) for correctness checking."""
    wih0, whh0, b0, wih1, whh1, b1 = params
    B = x.shape[0]
    H = HIDDEN

    def step(carry, x_t):
        h0, c0, h1, c1 = carry

        def cell(xt, h, c, wih, whh, b):
            gates = xt @ wih + h @ whh + b
            i = jax.nn.sigmoid(gates[:, 0 * H:1 * H])
            f = jax.nn.sigmoid(gates[:, 1 * H:2 * H])
            g = jnp.tanh(gates[:, 2 * H:3 * H])
            o = jax.nn.sigmoid(gates[:, 3 * H:4 * H])
            c_new = f * c + i * g
            h_new = o * jnp.tanh(c_new)
            return h_new, c_new

        h0, c0 = cell(x_t, h0, c0, wih0, whh0, b0)
        h1, c1 = cell(h0, h1, c1, wih1, whh1, b1)
        return (h0, c0, h1, c1), h1

    zeros = jnp.zeros((B, H), jnp.float32)
    _, out_tm = jax.lax.scan(step, (zeros, zeros, zeros, zeros),
                             jnp.transpose(x, (1, 0, 2)))
    return jnp.transpose(out_tm, (1, 0, 2))


if __name__ == "__main__":
    key = jax.random.PRNGKey(0)
    k_param, k_x = jax.random.split(key)

    B, T = 2, 8
    x = jax.random.normal(k_x, (B, T, INPUT), jnp.float32)
    params = init_params(k_param)

    out = jax.block_until_ready(lstm_forward(x, params))

    ref = lstm_reference(x, params)
    assert out.shape == (B, T, HIDDEN), out.shape
    assert jnp.allclose(out, ref, atol=2e-5, rtol=2e-5), "mismatch vs JAX reference"

    print("KERNEL_OK")
</pallas_src>

<mosaic_0001>
module attributes {stable_mosaic.version = 11 : i64} {
  func.func @lstm_kernel(%arg0: i32, %arg1: memref<64x10xf32, #tpu.memory_space<vmem>>, %arg2: memref<10x128xf32, #tpu.memory_space<vmem>>, %arg3: memref<32x128xf32, #tpu.memory_space<vmem>>, %arg4: memref<1x128xf32, #tpu.memory_space<vmem>>, %arg5: memref<32x128xf32, #tpu.memory_space<vmem>>, %arg6: memref<32x128xf32, #tpu.memory_space<vmem>>, %arg7: memref<1x128xf32, #tpu.memory_space<vmem>>, %arg8: memref<8x8x32xf32, #tpu.memory_space<vmem>>, %arg9: memref<64x128xf32, #tpu.memory_space<vmem>>, %arg10: memref<64x32xf32, #tpu.memory_space<vmem>>) attributes {dimension_semantics = [#tpu.dimension_semantics<arbitrary>], iteration_bounds = array<i64: 1>, scalar_prefetch = 0 : i64, scratch_operands = 2 : i64, tpu.core_type = #tpu.core_type<tc>, window_params = [{pipeline_mode = #tpu.pipeline_mode<synchronous>, transform_indices = @transform_0, window_bounds = array<i64: 64, 10>}, {pipeline_mode = #tpu.pipeline_mode<synchronous>, transform_indices = @transform_1, window_bounds = array<i64: 10, 128>}, {pipeline_mode = #tpu.pipeline_mode<synchronous>, transform_indices = @transform_2, window_bounds = array<i64: 32, 128>}, {pipeline_mode = #tpu.pipeline_mode<synchronous>, transform_indices = @transform_3, window_bounds = array<i64: 1, 128>}, {pipeline_mode = #tpu.pipeline_mode<synchronous>, transform_indices = @transform_4, window_bounds = array<i64: 32, 128>}, {pipeline_mode = #tpu.pipeline_mode<synchronous>, transform_indices = @transform_5, window_bounds = array<i64: 32, 128>}, {pipeline_mode = #tpu.pipeline_mode<synchronous>, transform_indices = @transform_6, window_bounds = array<i64: 1, 128>}, {pipeline_mode = #tpu.pipeline_mode<synchronous>, transform_indices = @transform_7, window_bounds = array<i64: 8, 8, 32>}]} {
    %0 = tpu.iota {dimensions = array<i32: 1>} : vector<8x128xi32>
    %c64_i32 = arith.constant 64 : i32
    %1 = vector.broadcast %c64_i32 : i32 to vector<8x128xi32>
    %2 = arith.cmpi sge, %0, %1 : vector<8x128xi32>
    %c96_i32 = arith.constant 96 : i32
    %3 = vector.broadcast %c96_i32 : i32 to vector<8x128xi32>
    %4 = arith.cmpi slt, %0, %3 : vector<8x128xi32>
    %5 = arith.andi %2, %4 : vector<8x128xi1>
    %cst = arith.constant 0.000000e+00 : f32
    %6 = vector.broadcast %cst : f32 to vector<8x32xf32>
    %c0 = arith.constant 0 : index
    %c0_0 = arith.constant 0 : index
    %7 = vector.load %arg1[%c0, %c0_0] : memref<64x10xf32, #tpu.memory_space<vmem>>, vector<64x10xf32>
    %c0_1 = arith.constant 0 : index
    %c0_2 = arith.constant 0 : index
    %8 = vector.load %arg2[%c0_1, %c0_2] : memref<10x128xf32, #tpu.memory_space<vmem>>, vector<10x128xf32>
    %cst_3 = arith.constant dense<0.000000e+00> : vector<64x128xf32>
    %9 = tpu.matmul %7, %8, %cst_3 {dimension_numbers = #tpu.dot_dimension_numbers<[1], [0], [0], [1], [0, 0, 1, 1], [], []>} : vector<64x10xf32>, vector<10x128xf32>, vector<64x128xf32> -> vector<64x128xf32>
    %c0_4 = arith.constant 0 : index
    %c0_5 = arith.constant 0 : index
    %10 = vector.load %arg4[%c0_4, %c0_5] : memref<1x128xf32, #tpu.memory_space<vmem>>, vector<1x128xf32>
    %11 = vector.broadcast %10 : vector<1x128xf32> to vector<64x128xf32>
    %12 = arith.addf %9, %11 : vector<64x128xf32>
    %c0_6 = arith.constant 0 : index
    %c0_7 = arith.constant 0 : index
    %13 = vector.load %arg9[%c0_6, %c0_7] : memref<64x128xf32, #tpu.memory_space<vmem>>, vector<64x128xf32>
    tpu.vector_store %arg9[%c0_6, %c0_7], %12 {strides = array<i32>} : memref<64x128xf32, #tpu.memory_space<vmem>>, vector<64x128xf32>,
    %c0_8 = arith.constant 0 : index
    %c0_9 = arith.constant 0 : index
    %14 = vector.load %arg3[%c0_8, %c0_9] : memref<32x128xf32, #tpu.memory_space<vmem>>, vector<32x128xf32>
    %c0_i32 = arith.constant 0 : i32
    %c8_i32 = arith.constant 8 : i32
    %15 = arith.muli %c0_i32, %c8_i32 : i32
    %16 = tpu.assume_multiple %15, 8 : i32
    %17 = arith.index_cast %16 : i32 to index
    %c0_10 = arith.constant 0 : index
    %18 = vector.load %arg9[%17, %c0_10] : memref<64x128xf32, #tpu.memory_space<vmem>>, vector<8x128xf32>
    %cst_11 = arith.constant dense<0.000000e+00> : vector<8x128xf32>
    %19 = tpu.matmul %6, %14, %cst_11 {dimension_numbers = #tpu.dot_dimension_numbers<[1], [0], [0], [1], [0, 0, 1, 1], [], []>} : vector<8x32xf32>, vector<32x128xf32>, vector<8x128xf32> -> vector<8x128xf32>
    %20 = arith.addf %18, %19 : vector<8x128xf32>
    %21 = arith.negf %20 : vector<8x128xf32>
    %22 = math.exp %21 : vector<8x128xf32>
    %cst_12 = arith.constant 1.000000e+00 : f32
    %23 = vector.broadcast %cst_12 : f32 to vector<8x128xf32>
    %24 = arith.addf %23, %22 : vector<8x128xf32>
    %25 = arith.divf %23, %24 : vector<8x128xf32>
    %26 = math.tanh %20 : vector<8x128xf32>
    %27 = arith.select %5, %26, %25 : vector<8x128xi1>, vector<8x128xf32>
    %28 = vector.extract_strided_slice %27 {offsets = [0, 0], sizes = [8, 32], strides = [1, 1]} : vector<8x128xf32> to vector<8x32xf32>
    %29 = vector.extract_strided_slice %27 {offsets = [0, 32], sizes = [8, 32], strides = [1, 1]} : vector<8x128xf32> to vector<8x32xf32>
    %30 = vector.extract_strided_slice %27 {offsets = [0, 64], sizes = [8, 32], strides = [1, 1]} : vector<8x128xf32> to vector<8x32xf32>
    %31 = vector.extract_strided_slice %27 {offsets = [0, 96], sizes = [8, 32], strides = [1, 1]} : vector<8x128xf32> to vector<8x32xf32>
    %32 = arith.mulf %29, %6 : vector<8x32xf32>
    %33 = arith.mulf %28, %30 : vector<8x32xf32>
    %34 = arith.addf %32, %33 : vector<8x32xf32>
    %35 = math.tanh %34 : vector<8x32xf32>
    %36 = arith.mulf %31, %35 : vector<8x32xf32>
    %37 = arith.index_cast %16 : i32 to index
    %c0_13 = arith.constant 0 : index
    %38 = vector.load %arg10[%37, %c0_13] : memref<64x32xf32, #tpu.memory_space<vmem>>, vector<8x32xf32>
    tpu.vector_store %arg10[%37, %c0_13], %36 {strides = array<i32>} : memref<64x32xf32, #tpu.memory_space<vmem>>, vector<8x32xf32>,
    %c1_i32 = arith.constant 1 : i32
    %c8_i32_14 = arith.constant 8 : i32
    %39 = arith.muli %c1_i32, %c8_i32_14 : i32
    %40 = tpu.assume_multiple %39, 8 : i32
    %41 = arith.index_cast %40 : i32 to index
    %c0_15 = arith.constant 0 : index
    %42 = vector.load %arg9[%41, %c0_15] : memref<64x128xf32, #tpu.memory_space<vmem>>, vector<8x128xf32>
    %cst_16 = arith.constant dense<0.000000e+00> : vector<8x128xf32>
    %43 = tpu.matmul %36, %14, %cst_16 {dimension_numbers = #tpu.dot_dimension_numbers<[1], [0], [0], [1], [0, 0, 1, 1], [], []>} : vector<8x32xf32>, vector<32x128xf32>, vector<8x128xf32> -> vector<8x128xf32>
    %44 = arith.addf %42, %43 : vector<8x128xf32>
    %45 = arith.negf %44 : vector<8x128xf32>
    %46 = math.exp %45 : vector<8x128xf32>
    %cst_17 = arith.constant 1.000000e+00 : f32
    %47 = vector.broadcast %cst_17 : f32 to vector<8x128xf32>
    %48 = arith.addf %47, %46 : vector<8x128xf32>
    %49 = arith.divf %47, %48 : vector<8x128xf32>
    %50 = math.tanh %44 : vector<8x128xf32>
    %51 = arith.select %5, %50, %49 : vector<8x128xi1>, vector<8x128xf32>
    %52 = vector.extract_strided_slice %51 {offsets = [0, 0], sizes = [8, 32], strides = [1, 1]} : vector<8x128xf32> to vector<8x32xf32>
    %53 = vector.extract_strided_slice %51 {offsets = [0, 32], sizes = [8, 32], strides = [1, 1]} : vector<8x128xf32> to vector<8x32xf32>
    %54 = vector.extract_strided_slice %51 {offsets = [0, 64], sizes = [8, 32], strides = [1, 1]} : vector<8x128xf32> to vector<8x32xf32>
    %55 = vector.extract_strided_slice %51 {offsets = [0, 96], sizes = [8, 32], strides = [1, 1]} : vector<8x128xf32> to vector<8x32xf32>
    %56 = arith.mulf %53, %34 : vector<8x32xf32>
    %57 = arith.mulf %52, %54 : vector<8x32xf32>
    %58 = arith.addf %56, %57 : vector<8x32xf32>
    %59 = math.tanh %58 : vector<8x32xf32>
    %60 = arith.mulf %55, %59 : vector<8x32xf32>
    %61 = arith.index_cast %40 : i32 to index
    %c0_18 = arith.constant 0 : index
    %62 = vector.load %arg10[%61, %c0_18] : memref<64x32xf32, #tpu.memory_space<vmem>>, vector<8x32xf32>
    tpu.vector_store %arg10[%61, %c0_18], %60 {strides = array<i32>} : memref<64x32xf32, #tpu.memory_space<vmem>>, vector<8x32xf32>,
    %c2_i32 = arith.constant 2 : i32
    %c8_i32_19 = arith.constant 8 : i32
    %63 = arith.muli %c2_i32, %c8_i32_19 : i32
    %64 = tpu.assume_multiple %63, 8 : i32
    %65 = arith.index_cast %64 : i32 to index
    %c0_20 = arith.constant 0 : index
    %66 = vector.load %arg9[%65, %c0_20] : memref<64x128xf32, #tpu.memory_space<vmem>>, vector<8x128xf32>
    %cst_21 = arith.constant dense<0.000000e+00> : vector<8x128xf32>
    %67 = tpu.matmul %60, %14, %cst_21 {dimension_numbers = #tpu.dot_dimension_numbers<[1], [0], [0], [1], [0, 0, 1, 1], [], []>} : vector<8x32xf32>, vector<32x128xf32>, vector<8x128xf32> -> vector<8x128xf32>
    %68 = arith.addf %66, %67 : vector<8x128xf32>
    %69 = arith.negf %68 : vector<8x128xf32>
    %70 = math.exp %69 : vector<8x128xf32>
    %cst_22 = arith.constant 1.000000e+00 : f32
    %71 = vector.broadcast %cst_22 : f32 to vector<8x128xf32>
    %72 = arith.addf %71, %70 : vector<8x128xf32>
    %73 = arith.divf %71, %72 : vector<8x128xf32>
    %74 = math.tanh %68 : vector<8x128xf32>
    %75 = arith.select %5, %74, %73 : vector<8x128xi1>, vector<8x128xf32>
    %76 = vector.extract_strided_slice %75 {offsets = [0, 0], sizes = [8, 32], strides = [1, 1]} : vector<8x128xf32> to vector<8x32xf32>
    %77 = vector.extract_strided_slice %75 {offsets = [0, 32], sizes = [8, 32], strides = [1, 1]} : vector<8x128xf32> to vector<8x32xf32>
    %78 = vector.extract_strided_slice %75 {offsets = [0, 64], sizes = [8, 32], strides = [1, 1]} : vector<8x128xf32> to vector<8x32xf32>
    %79 = vector.extract_strided_slice %75 {offsets = [0, 96], sizes = [8, 32], strides = [1, 1]} : vector<8x128xf32> to vector<8x32xf32>
    %80 = arith.mulf %77, %58 : vector<8x32xf32>
    %81 = arith.mulf %76, %78 : vector<8x32xf32>
    %82 = arith.addf %80, %81 : vector<8x32xf32>
    %83 = math.tanh %82 : vector<8x32xf32>
    %84 = arith.mulf %79, %83 : vector<8x32xf32>
    %85 = arith.index_cast %64 : i32 to index
    %c0_23 = arith.constant 0 : index
    %86 = vector.load %arg10[%85, %c0_23] : memref<64x32xf32, #tpu.memory_space<vmem>>, vector<8x32xf32>
    tpu.vector_store %arg10[%85, %c0_23], %84 {strides = array<i32>} : memref<64x32xf32, #tpu.memory_space<vmem>>, vector<8x32xf32>,
    %c3_i32 = arith.constant 3 : i32
    %c8_i32_24 = arith.constant 8 : i32
    %87 = arith.muli %c3_i32, %c8_i32_24 : i32
    %88 = tpu.assume_multiple %87, 8 : i32
    %89 = arith.index_cast %88 : i32 to index
    %c0_25 = arith.constant 0 : index
    %90 = vector.load %arg9[%89, %c0_25] : memref<64x128xf32, #tpu.memory_space<vmem>>, vector<8x128xf32>
    %cst_26 = arith.constant dense<0.000000e+00> : vector<8x128xf32>
    %91 = tpu.matmul %84, %14, %cst_26 {dimension_numbers = #tpu.dot_dimension_numbers<[1], [0], [0], [1], [0, 0, 1, 1], [], []>} : vector<8x32xf32>, vector<32x128xf32>, vector<8x128xf32> -> vector<8x128xf32>
    %92 = arith.addf %90, %91 : vector<8x128xf32>
    %93 = arith.negf %92 : vector<8x128xf32>
    %94 = math.exp %93 : vector<8x128xf32>
    %cst_27 = arith.constant 1.000000e+00 : f32
    %95 = vector.broadcast %cst_27 : f32 to vector<8x128xf32>
    %96 = arith.addf %95, %94 : vector<8x128xf32>
    %97 = arith.divf %95, %96 : vector<8x128xf32>
    %98 = math.tanh %92 : vector<8x128xf32>
    %99 = arith.select %5, %98, %97 : vector<8x128xi1>, vector<8x128xf32>
    %100 = vector.extract_strided_slice %99 {offsets = [0, 0], sizes = [8, 32], strides = [1, 1]} : vector<8x128xf32> to vector<8x32xf32>
    %101 = vector.extract_strided_slice %99 {offsets = [0, 32], sizes = [8, 32], strides = [1, 1]} : vector<8x128xf32> to vector<8x32xf32>
    %102 = vector.extract_strided_slice %99 {offsets = [0, 64], sizes = [8, 32], strides = [1, 1]} : vector<8x128xf32> to vector<8x32xf32>
    %103 = vector.extract_strided_slice %99 {offsets = [0, 96], sizes = [8, 32], strides = [1, 1]} : vector<8x128xf32> to vector<8x32xf32>
    %104 = arith.mulf %101, %82 : vector<8x32xf32>
    %105 = arith.mulf %100, %102 : vector<8x32xf32>
    %106 = arith.addf %104, %105 : vector<8x32xf32>
    %107 = math.tanh %106 : vector<8x32xf32>
    %108 = arith.mulf %103, %107 : vector<8x32xf32>
    %109 = arith.index_cast %88 : i32 to index
    %c0_28 = arith.constant 0 : index
    %110 = vector.load %arg10[%109, %c0_28] : memref<64x32xf32, #tpu.memory_space<vmem>>, vector<8x32xf32>
    tpu.vector_store %arg10[%109, %c0_28], %108 {strides = array<i32>} : memref<64x32xf32, #tpu.memory_space<vmem>>, vector<8x32xf32>,
    %c4_i32 = arith.constant 4 : i32
    %c8_i32_29 = arith.constant 8 : i32
    %111 = arith.muli %c4_i32, %c8_i32_29 : i32
    %112 = tpu.assume_multiple %111, 8 : i32
    %113 = arith.index_cast %112 : i32 to index
    %c0_30 = arith.constant 0 : index
    %114 = vector.load %arg9[%113, %c0_30] : memref<64x128xf32, #tpu.memory_space<vmem>>, vector<8x128xf32>
    %cst_31 = arith.constant dense<0.000000e+00> : vector<8x128xf32>
    %115 = tpu.matmul %108, %14, %cst_31 {dimension_numbers = #tpu.dot_dimension_numbers<[1], [0], [0], [1], [0, 0, 1, 1], [], []>} : vector<8x32xf32>, vector<32x128xf32>, vector<8x128xf32> -> vector<8x128xf32>
    %116 = arith.addf %114, %115 : vector<8x128xf32>
    %117 = arith.negf %116 : vector<8x128xf32>
    %118 = math.exp %117 : vector<8x128xf32>
    %cst_32 = arith.constant 1.000000e+00 : f32
    %119 = vector.broadcast %cst_32 : f32 to vector<8x128xf32>
    %120 = arith.addf %119, %118 : vector<8x128xf32>
    %121 = arith.divf %119, %120 : vector<8x128xf32>
    %122 = math.tanh %116 : vector<8x128xf32>
    %123 = arith.select %5, %122, %121 : vector<8x128xi1>, vector<8x128xf32>
    %124 = vector.extract_strided_slice %123 {offsets = [0, 0], sizes = [8, 32], strides = [1, 1]} : vector<8x128xf32> to vector<8x32xf32>
    %125 = vector.extract_strided_slice %123 {offsets = [0, 32], sizes = [8, 32], strides = [1, 1]} : vector<8x128xf32> to vector<8x32xf32>
    %126 = vector.extract_strided_slice %123 {offsets = [0, 64], sizes = [8, 32], strides = [1, 1]} : vector<8x128xf32> to vector<8x32xf32>
    %127 = vector.extract_strided_slice %123 {offsets = [0, 96], sizes = [8, 32], strides = [1, 1]} : vector<8x128xf32> to vector<8x32xf32>
    %128 = arith.mulf %125, %106 : vector<8x32xf32>
    %129 = arith.mulf %124, %126 : vector<8x32xf32>
    %130 = arith.addf %128, %129 : vector<8x32xf32>
    %131 = math.tanh %130 : vector<8x32xf32>
    %132 = arith.mulf %127, %131 : vector<8x32xf32>
    %133 = arith.index_cast %112 : i32 to index
    %c0_33 = arith.constant 0 : index
    %134 = vector.load %arg10[%133, %c0_33] : memref<64x32xf32, #tpu.memory_space<vmem>>, vector<8x32xf32>
    tpu.vector_store %arg10[%133, %c0_33], %132 {strides = array<i32>} : memref<64x32xf32, #tpu.memory_space<vmem>>, vector<8x32xf32>,
    %c5_i32 = arith.constant 5 : i32
    %c8_i32_34 = arith.constant 8 : i32
    %135 = arith.muli %c5_i32, %c8_i32_34 : i32
    %136 = tpu.assume_multiple %135, 8 : i32
    %137 = arith.index_cast %136 : i32 to index
    %c0_35 = arith.constant 0 : index
    %138 = vector.load %arg9[%137, %c0_35] : memref<64x128xf32, #tpu.memory_space<vmem>>, vector<8x128xf32>
    %cst_36 = arith.constant dense<0.000000e+00> : vector<8x128xf32>
    %139 = tpu.matmul %132, %14, %cst_36 {dimension_numbers = #tpu.dot_dimension_numbers<[1], [0], [0], [1], [0, 0, 1, 1], [], []>} : vector<8x32xf32>, vector<32x128xf32>, vector<8x128xf32> -> vector<8x128xf32>
    %140 = arith.addf %138, %139 : vector<8x128xf32>
    %141 = arith.negf %140 : vector<8x128xf32>
    %142 = math.exp %141 : vector<8x128xf32>
    %cst_37 = arith.constant 1.000000e+00 : f32
    %143 = vector.broadcast %cst_37 : f32 to vector<8x128xf32>
    %144 = arith.addf %143, %142 : vector<8x128xf32>
    %145 = arith.divf %143, %144 : vector<8x128xf32>
    %146 = math.tanh %140 : vector<8x128xf32>
    %147 = arith.select %5, %146, %145 : vector<8x128xi1>, vector<8x128xf32>
    %148 = vector.extract_strided_slice %147 {offsets = [0, 0], sizes = [8, 32], strides = [1, 1]} : vector<8x128xf32> to vector<8x32xf32>
    %149 = vector.extract_strided_slice %147 {offsets = [0, 32], sizes = [8, 32], strides = [1, 1]} : vector<8x128xf32> to vector<8x32xf32>
    %150 = vector.extract_strided_slice %147 {offsets = [0, 64], sizes = [8, 32], strides = [1, 1]} : vector<8x128xf32> to vector<8x32xf32>
    %151 = vector.extract_strided_slice %147 {offsets = [0, 96], sizes = [8, 32], strides = [1, 1]} : vector<8x128xf32> to vector<8x32xf32>
    %152 = arith.mulf %149, %130 : vector<8x32xf32>
    %153 = arith.mulf %148, %150 : vector<8x32xf32>
    %154 = arith.addf %152, %153 : vector<8x32xf32>
    %155 = math.tanh %154 : vector<8x32xf32>
    %156 = arith.mulf %151, %155 : vector<8x32xf32>
    %157 = arith.index_cast %136 : i32 to index
    %c0_38 = arith.constant 0 : index
    %158 = vector.load %arg10[%157, %c0_38] : memref<64x32xf32, #tpu.memory_space<vmem>>, vector<8x32xf32>
    tpu.vector_store %arg10[%157, %c0_38], %156 {strides = array<i32>} : memref<64x32xf32, #tpu.memory_space<vmem>>, vector<8x32xf32>,
    %c6_i32 = arith.constant 6 : i32
    %c8_i32_39 = arith.constant 8 : i32
    %159 = arith.muli %c6_i32, %c8_i32_39 : i32
    %160 = tpu.assume_multiple %159, 8 : i32
    %161 = arith.index_cast %160 : i32 to index
    %c0_40 = arith.constant 0 : index
    %162 = vector.load %arg9[%161, %c0_40] : memref<64x128xf32, #tpu.memory_space<vmem>>, vector<8x128xf32>
    %cst_41 = arith.constant dense<0.000000e+00> : vector<8x128xf32>
    %163 = tpu.matmul %156, %14, %cst_41 {dimension_numbers = #tpu.dot_dimension_numbers<[1], [0], [0], [1], [0, 0, 1, 1], [], []>} : vector<8x32xf32>, vector<32x128xf32>, vector<8x128xf32> -> vector<8x128xf32>
    %164 = arith.addf %162, %163 : vector<8x128xf32>
    %165 = arith.negf %164 : vector<8x128xf32>
    %166 = math.exp %165 : vector<8x128xf32>
    %cst_42 = arith.constant 1.000000e+00 : f32
    %167 = vector.broadcast %cst_42 : f32 to vector<8x128xf32>
    %168 = arith.addf %167, %166 : vector<8x128xf32>
    %169 = arith.divf %167, %168 : vector<8x128xf32>
    %170 = math.tanh %164 : vector<8x128xf32>
    %171 = arith.select %5, %170, %169 : vector<8x128xi1>, vector<8x128xf32>
    %172 = vector.extract_strided_slice %171 {offsets = [0, 0], sizes = [8, 32], strides = [1, 1]} : vector<8x128xf32> to vector<8x32xf32>
    %173 = vector.extract_strided_slice %171 {offsets = [0, 32], sizes = [8, 32], strides = [1, 1]} : vector<8x128xf32> to vector<8x32xf32>
    %174 = vector.extract_strided_slice %171 {offsets = [0, 64], sizes = [8, 32], strides = [1, 1]} : vector<8x128xf32> to vector<8x32xf32>
    %175 = vector.extract_strided_slice %171 {offsets = [0, 96], sizes = [8, 32], strides = [1, 1]} : vector<8x128xf32> to vector<8x32xf32>
    %176 = arith.mulf %173, %154 : vector<8x32xf32>
    %177 = arith.mulf %172, %174 : vector<8x32xf32>
    %178 = arith.addf %176, %177 : vector<8x32xf32>
    %179 = math.tanh %178 : vector<8x32xf32>
    %180 = arith.mulf %175, %179 : vector<8x32xf32>
    %181 = arith.index_cast %160 : i32 to index
    %c0_43 = arith.constant 0 : index
    %182 = vector.load %arg10[%181, %c0_43] : memref<64x32xf32, #tpu.memory_space<vmem>>, vector<8x32xf32>
    tpu.vector_store %arg10[%181, %c0_43], %180 {strides = array<i32>} : memref<64x32xf32, #tpu.memory_space<vmem>>, vector<8x32xf32>,
    %c7_i32 = arith.constant 7 : i32
    %c8_i32_44 = arith.constant 8 : i32
    %183 = arith.muli %c7_i32, %c8_i32_44 : i32
    %184 = tpu.assume_multiple %183, 8 : i32
    %185 = arith.index_cast %184 : i32 to index
    %c0_45 = arith.constant 0 : index
    %186 = vector.load %arg9[%185, %c0_45] : memref<64x128xf32, #tpu.memory_space<vmem>>, vector<8x128xf32>
    %cst_46 = arith.constant dense<0.000000e+00> : vector<8x128xf32>
    %187 = tpu.matmul %180, %14, %cst_46 {dimension_numbers = #tpu.dot_dimension_numbers<[1], [0], [0], [1], [0, 0, 1, 1], [], []>} : vector<8x32xf32>, vector<32x128xf32>, vector<8x128xf32> -> vector<8x128xf32>
    %188 = arith.addf %186, %187 : vector<8x128xf32>
    %189 = arith.negf %188 : vector<8x128xf32>
    %190 = math.exp %189 : vector<8x128xf32>
    %cst_47 = arith.constant 1.000000e+00 : f32
    %191 = vector.broadcast %cst_47 : f32 to vector<8x128xf32>
    %192 = arith.addf %191, %190 : vector<8x128xf32>
    %193 = arith.divf %191, %192 : vector<8x128xf32>
    %194 = math.tanh %188 : vector<8x128xf32>
    %195 = arith.select %5, %194, %193 : vector<8x128xi1>, vector<8x128xf32>
    %196 = vector.extract_strided_slice %195 {offsets = [0, 0], sizes = [8, 32], strides = [1, 1]} : vector<8x128xf32> to vector<8x32xf32>
    %197 = vector.extract_strided_slice %195 {offsets = [0, 32], sizes = [8, 32], strides = [1, 1]} : vector<8x128xf32> to vector<8x32xf32>
    %198 = vector.extract_strided_slice %195 {offsets = [0, 64], sizes = [8, 32], strides = [1, 1]} : vector<8x128xf32> to vector<8x32xf32>
    %199 = vector.extract_strided_slice %195 {offsets = [0, 96], sizes = [8, 32], strides = [1, 1]} : vector<8x128xf32> to vector<8x32xf32>
    %200 = arith.mulf %197, %178 : vector<8x32xf32>
    %201 = arith.mulf %196, %198 : vector<8x32xf32>
    %202 = arith.addf %200, %201 : vector<8x32xf32>
    %203 = math.tanh %202 : vector<8x32xf32>
    %204 = arith.mulf %199, %203 : vector<8x32xf32>
    %205 = arith.index_cast %184 : i32 to index
    %c0_48 = arith.constant 0 : index
    %206 = vector.load %arg10[%205, %c0_48] : memref<64x32xf32, #tpu.memory_space<vmem>>, vector<8x32xf32>
    tpu.vector_store %arg10[%205, %c0_48], %204 {strides = array<i32>} : memref<64x32xf32, #tpu.memory_space<vmem>>, vector<8x32xf32>,
    %c8_i32_49 = arith.constant 8 : i32
    %c0_50 = arith.constant 0 : index
    %c0_51 = arith.constant 0 : index
    %207 = vector.load %arg10[%c0_50, %c0_51] : memref<64x32xf32, #tpu.memory_space<vmem>>, vector<64x32xf32>
    %c0_52 = arith.constant 0 : index
    %c0_53 = arith.constant 0 : index
    %208 = vector.load %arg5[%c0_52, %c0_53] : memref<32x128xf32, #tpu.memory_space<vmem>>, vector<32x128xf32>
    %cst_54 = arith.constant dense<0.000000e+00> : vector<64x128xf32>
    %209 = tpu.matmul %207, %208, %cst_54 {dimension_numbers = #tpu.dot_dimension_numbers<[1], [0], [0], [1], [0, 0, 1, 1], [], []>} : vector<64x32xf32>, vector<32x128xf32>, vector<64x128xf32> -> vector<64x128xf32>
    %c0_55 = arith.constant 0 : index
    %c0_56 = arith.constant 0 : index
    %210 = vector.load %arg7[%c0_55, %c0_56] : memref<1x128xf32, #tpu.memory_space<vmem>>, vector<1x128xf32>
    %211 = vector.broadcast %210 : vector<1x128xf32> to vector<64x128xf32>
    %212 = arith.addf %209, %211 : vector<64x128xf32>
    %c0_57 = arith.constant 0 : index
    %c0_58 = arith.constant 0 : index
    %213 = vector.load %arg9[%c0_57, %c0_58] : memref<64x128xf32, #tpu.memory_space<vmem>>, vector<64x128xf32>
    tpu.vector_store %arg9[%c0_57, %c0_58], %212 {strides = array<i32>} : memref<64x128xf32, #tpu.memory_space<vmem>>, vector<64x128xf32>,
    %c0_59 = arith.constant 0 : index
    %c0_60 = arith.constant 0 : index
    %214 = vector.load %arg6[%c0_59, %c0_60] : memref<32x128xf32, #tpu.memory_space<vmem>>, vector<32x128xf32>
    %c0_i32_61 = arith.constant 0 : i32
    %c8_i32_62 = arith.constant 8 : i32
    %215 = arith.muli %c0_i32_61, %c8_i32_62 : i32
    %216 = tpu.assume_multiple %215, 8 : i32
    %217 = arith.index_cast %216 : i32 to index
    %c0_63 = arith.constant 0 : index
    %218 = vector.load %arg9[%217, %c0_63] : memref<64x128xf32, #tpu.memory_space<vmem>>, vector<8x128xf32>
    %cst_64 = arith.constant dense<0.000000e+00> : vector<8x128xf32>
    %219 = tpu.matmul %6, %214, %cst_64 {dimension_numbers = #tpu.dot_dimension_numbers<[1], [0], [0], [1], [0, 0, 1, 1], [], []>} : vector<8x32xf32>, vector<32x128xf32>, vector<8x128xf32> -> vector<8x128xf32>
    %220 = arith.addf %218, %219 : vector<8x128xf32>
    %221 = arith.negf %220 : vector<8x128xf32>
    %222 = math.exp %221 : vector<8x128xf32>
    %cst_65 = arith.constant 1.000000e+00 : f32
    %223 = vector.broadcast %cst_65 : f32 to vector<8x128xf32>
    %224 = arith.addf %223, %222 : vector<8x128xf32>
    %225 = arith.divf %223, %224 : vector<8x128xf32>
    %226 = math.tanh %220 : vector<8x128xf32>
    %227 = arith.select %5, %226, %225 : vector<8x128xi1>, vector<8x128xf32>
    %228 = vector.extract_strided_slice %227 {offsets = [0, 0], sizes = [8, 32], strides = [1, 1]} : vector<8x128xf32> to vector<8x32xf32>
    %229 = vector.extract_strided_slice %227 {offsets = [0, 32], sizes = [8, 32], strides = [1, 1]} : vector<8x128xf32> to vector<8x32xf32>
    %230 = vector.extract_strided_slice %227 {offsets = [0, 64], sizes = [8, 32], strides = [1, 1]} : vector<8x128xf32> to vector<8x32xf32>
    %231 = vector.extract_strided_slice %227 {offsets = [0, 96], sizes = [8, 32], strides = [1, 1]} : vector<8x128xf32> to vector<8x32xf32>
    %232 = arith.mulf %229, %6 : vector<8x32xf32>
    %233 = arith.mulf %228, %230 : vector<8x32xf32>
    %234 = arith.addf %232, %233 : vector<8x32xf32>
    %235 = math.tanh %234 : vector<8x32xf32>
    %236 = arith.mulf %231, %235 : vector<8x32xf32>
    %237 = arith.index_cast %c0_i32_61 : i32 to index
    %c0_66 = arith.constant 0 : index
    %c0_67 = arith.constant 0 : index
    %238 = vector.load %arg8[%237, %c0_66, %c0_67] : memref<8x8x32xf32, #tpu.memory_space<vmem>>, vector<1x8x32xf32>
    %239 = vector.shape_cast %238 : vector<1x8x32xf32> to vector<8x32xf32>
    %240 = vector.shape_cast %236 : vector<8x32xf32> to vector<1x8x32xf32>
    tpu.vector_store %arg8[%237, %c0_66, %c0_67], %240 {strides = array<i32>} : memref<8x8x32xf32, #tpu.memory_space<vmem>>, vector<1x8x32xf32>,
    %c1_i32_68 = arith.constant 1 : i32
    %c8_i32_69 = arith.constant 8 : i32
    %241 = arith.muli %c1_i32_68, %c8_i32_69 : i32
    %242 = tpu.assume_multiple %241, 8 : i32
    %243 = arith.index_cast %242 : i32 to index
    %c0_70 = arith.constant 0 : index
    %244 = vector.load %arg9[%243, %c0_70] : memref<64x128xf32, #tpu.memory_space<vmem>>, vector<8x128xf32>
    %cst_71 = arith.constant dense<0.000000e+00> : vector<8x128xf32>
    %245 = tpu.matmul %236, %214, %cst_71 {dimension_numbers = #tpu.dot_dimension_numbers<[1], [0], [0], [1], [0, 0, 1, 1], [], []>} : vector<8x32xf32>, vector<32x128xf32>, vector<8x128xf32> -> vector<8x128xf32>
    %246 = arith.addf %244, %245 : vector<8x128xf32>
    %247 = arith.negf %246 : vector<8x128xf32>
    %248 = math.exp %247 : vector<8x128xf32>
    %cst_72 = arith.constant 1.000000e+00 : f32
    %249 = vector.broadcast %cst_72 : f32 to vector<8x128xf32>
    %250 = arith.addf %249, %248 : vector<8x128xf32>
    %251 = arith.divf %249, %250 : vector<8x128xf32>
    %252 = math.tanh %246 : vector<8x128xf32>
    %253 = arith.select %5, %252, %251 : vector<8x128xi1>, vector<8x128xf32>
    %254 = vector.extract_strided_slice %253 {offsets = [0, 0], sizes = [8, 32], strides = [1, 1]} : vector<8x128xf32> to vector<8x32xf32>
    %255 = vector.extract_strided_slice %253 {offsets = [0, 32], sizes = [8, 32], strides = [1, 1]} : vector<8x128xf32> to vector<8x32xf32>
    %256 = vector.extract_strided_slice %253 {offsets = [0, 64], sizes = [8, 32], strides = [1, 1]} : vector<8x128xf32> to vector<8x32xf32>
    %257 = vector.extract_strided_slice %253 {offsets = [0, 96], sizes = [8, 32], strides = [1, 1]} : vector<8x128xf32> to vector<8x32xf32>
    %258 = arith.mulf %255, %234 : vector<8x32xf32>
    %259 = arith.mulf %254, %256 : vector<8x32xf32>
    %260 = arith.addf %258, %259 : vector<8x32xf32>
    %261 = math.tanh %260 : vector<8x32xf32>
    %262 = arith.mulf %257, %261 : vector<8x32xf32>
    %263 = arith.index_cast %c1_i32_68 : i32 to index
    %c0_73 = arith.constant 0 : index
    %c0_74 = arith.constant 0 : index
    %264 = vector.load %arg8[%263, %c0_73, %c0_74] : memref<8x8x32xf32, #tpu.memory_space<vmem>>, vector<1x8x32xf32>
    %265 = vector.shape_cast %264 : vector<1x8x32xf32> to vector<8x32xf32>
    %266 = vector.shape_cast %262 : vector<8x32xf32> to vector<1x8x32xf32>
    tpu.vector_store %arg8[%263, %c0_73, %c0_74], %266 {strides = array<i32>} : memref<8x8x32xf32, #tpu.memory_space<vmem>>, vector<1x8x32xf32>,
    %c2_i32_75 = arith.constant 2 : i32
    %c8_i32_76 = arith.constant 8 : i32
    %267 = arith.muli %c2_i32_75, %c8_i32_76 : i32
    %268 = tpu.assume_multiple %267, 8 : i32
    %269 = arith.index_cast %268 : i32 to index
    %c0_77 = arith.constant 0 : index
    %270 = vector.load %arg9[%269, %c0_77] : memref<64x128xf32, #tpu.memory_space<vmem>>, vector<8x128xf32>
    %cst_78 = arith.constant dense<0.000000e+00> : vector<8x128xf32>
    %271 = tpu.matmul %262, %214, %cst_78 {dimension_numbers = #tpu.dot_dimension_numbers<[1], [0], [0], [1], [0, 0, 1, 1], [], []>} : vector<8x32xf32>, vector<32x128xf32>, vector<8x128xf32> -> vector<8x128xf32>
    %272 = arith.addf %270, %271 : vector<8x128xf32>
    %273 = arith.negf %272 : vector<8x128xf32>
    %274 = math.exp %273 : vector<8x128xf32>
    %cst_79 = arith.constant 1.000000e+00 : f32
    %275 = vector.broadcast %cst_79 : f32 to vector<8x128xf32>
    %276 = arith.addf %275, %274 : vector<8x128xf32>
    %277 = arith.divf %275, %276 : vector<8x128xf32>
    %278 = math.tanh %272 : vector<8x128xf32>
    %279 = arith.select %5, %278, %277 : vector<8x128xi1>, vector<8x128xf32>
    %280 = vector.extract_strided_slice %279 {offsets = [0, 0], sizes = [8, 32], strides = [1, 1]} : vector<8x128xf32> to vector<8x32xf32>
    %281 = vector.extract_strided_slice %279 {offsets = [0, 32], sizes = [8, 32], strides = [1, 1]} : vector<8x128xf32> to vector<8x32xf32>
    %282 = vector.extract_strided_slice %279 {offsets = [0, 64], sizes = [8, 32], strides = [1, 1]} : vector<8x128xf32> to vector<8x32xf32>
    %283 = vector.extract_strided_slice %279 {offsets = [0, 96], sizes = [8, 32], strides = [1, 1]} : vector<8x128xf32> to vector<8x32xf32>
    %284 = arith.mulf %281, %260 : vector<8x32xf32>
    %285 = arith.mulf %280, %282 : vector<8x32xf32>
    %286 = arith.addf %284, %285 : vector<8x32xf32>
    %287 = math.tanh %286 : vector<8x32xf32>
    %288 = arith.mulf %283, %287 : vector<8x32xf32>
    %289 = arith.index_cast %c2_i32_75 : i32 to index
    %c0_80 = arith.constant 0 : index
    %c0_81 = arith.constant 0 : index
    %290 = vector.load %arg8[%289, %c0_80, %c0_81] : memref<8x8x32xf32, #tpu.memory_space<vmem>>, vector<1x8x32xf32>
    %291 = vector.shape_cast %290 : vector<1x8x32xf32> to vector<8x32xf32>
    %292 = vector.shape_cast %288 : vector<8x32xf32> to vector<1x8x32xf32>
    tpu.vector_store %arg8[%289, %c0_80, %c0_81], %292 {strides = array<i32>} : memref<8x8x32xf32, #tpu.memory_space<vmem>>, vector<1x8x32xf32>,
    %c3_i32_82 = arith.constant 3 : i32
    %c8_i32_83 = arith.constant 8 : i32
    %293 = arith.muli %c3_i32_82, %c8_i32_83 : i32
    %294 = tpu.assume_multiple %293, 8 : i32
    %295 = arith.index_cast %294 : i32 to index
    %c0_84 = arith.constant 0 : index
    %296 = vector.load %arg9[%295, %c0_84] : memref<64x128xf32, #tpu.memory_space<vmem>>, vector<8x128xf32>
    %cst_85 = arith.constant dense<0.000000e+00> : vector<8x128xf32>
    %297 = tpu.matmul %288, %214, %cst_85 {dimension_numbers = #tpu.dot_dimension_numbers<[1], [0], [0], [1], [0, 0, 1, 1], [], []>} : vector<8x32xf32>, vector<32x128xf32>, vector<8x128xf32> -> vector<8x128xf32>
    %298 = arith.addf %296, %297 : vector<8x128xf32>
    %299 = arith.negf %298 : vector<8x128xf32>
    %300 = math.exp %299 : vector<8x128xf32>
    %cst_86 = arith.constant 1.000000e+00 : f32
    %301 = vector.broadcast %cst_86 : f32 to vector<8x128xf32>
    %302 = arith.addf %301, %300 : vector<8x128xf32>
    %303 = arith.divf %301, %302 : vector<8x128xf32>
    %304 = math.tanh %298 : vector<8x128xf32>
    %305 = arith.select %5, %304, %303 : vector<8x128xi1>, vector<8x128xf32>
    %306 = vector.extract_strided_slice %305 {offsets = [0, 0], sizes = [8, 32], strides = [1, 1]} : vector<8x128xf32> to vector<8x32xf32>
    %307 = vector.extract_strided_slice %305 {offsets = [0, 32], sizes = [8, 32], strides = [1, 1]} : vector<8x128xf32> to vector<8x32xf32>
    %308 = vector.extract_strided_slice %305 {offsets = [0, 64], sizes = [8, 32], strides = [1, 1]} : vector<8x128xf32> to vector<8x32xf32>
    %309 = vector.extract_strided_slice %305 {offsets = [0, 96], sizes = [8, 32], strides = [1, 1]} : vector<8x128xf32> to vector<8x32xf32>
    %310 = arith.mulf %307, %286 : vector<8x32xf32>
    %311 = arith.mulf %306, %308 : vector<8x32xf32>
    %312 = arith.addf %310, %311 : vector<8x32xf32>
    %313 = math.tanh %312 : vector<8x32xf32>
    %314 = arith.mulf %309, %313 : vector<8x32xf32>
    %315 = arith.index_cast %c3_i32_82 : i32 to index
    %c0_87 = arith.constant 0 : index
    %c0_88 = arith.constant 0 : index
    %316 = vector.load %arg8[%315, %c0_87, %c0_88] : memref<8x8x32xf32, #tpu.memory_space<vmem>>, vector<1x8x32xf32>
    %317 = vector.shape_cast %316 : vector<1x8x32xf32> to vector<8x32xf32>
    %318 = vector.shape_cast %314 : vector<8x32xf32> to vector<1x8x32xf32>
    tpu.vector_store %arg8[%315, %c0_87, %c0_88], %318 {strides = array<i32>} : memref<8x8x32xf32, #tpu.memory_space<vmem>>, vector<1x8x32xf32>,
    %c4_i32_89 = arith.constant 4 : i32
    %c8_i32_90 = arith.constant 8 : i32
    %319 = arith.muli %c4_i32_89, %c8_i32_90 : i32
    %320 = tpu.assume_multiple %319, 8 : i32
    %321 = arith.index_cast %320 : i32 to index
    %c0_91 = arith.constant 0 : index
    %322 = vector.load %arg9[%321, %c0_91] : memref<64x128xf32, #tpu.memory_space<vmem>>, vector<8x128xf32>
    %cst_92 = arith.constant dense<0.000000e+00> : vector<8x128xf32>
    %323 = tpu.matmul %314, %214, %cst_92 {dimension_numbers = #tpu.dot_dimension_numbers<[1], [0], [0], [1], [0, 0, 1, 1], [], []>} : vector<8x32xf32>, vector<32x128xf32>, vector<8x128xf32> -> vector<8x128xf32>
    %324 = arith.addf %322, %323 : vector<8x128xf32>
    %325 = arith.negf %324 : vector<8x128xf32>
    %326 = math.exp %325 : vector<8x128xf32>
    %cst_93 = arith.constant 1.000000e+00 : f32
    %327 = vector.broadcast %cst_93 : f32 to vector<8x128xf32>
    %328 = arith.addf %327, %326 : vector<8x128xf32>
    %329 = arith.divf %327, %328 : vector<8x128xf32>
    %330 = math.tanh %324 : vector<8x128xf32>
    %331 = arith.select %5, %330, %329 : vector<8x128xi1>, vector<8x128xf32>
    %332 = vector.extract_strided_slice %331 {offsets = [0, 0], sizes = [8, 32], strides = [1, 1]} : vector<8x128xf32> to vector<8x32xf32>
    %333 = vector.extract_strided_slice %331 {offsets = [0, 32], sizes = [8, 32], strides = [1, 1]} : vector<8x128xf32> to vector<8x32xf32>
    %334 = vector.extract_strided_slice %331 {offsets = [0, 64], sizes = [8, 32], strides = [1, 1]} : vector<8x128xf32> to vector<8x32xf32>
    %335 = vector.extract_strided_slice %331 {offsets = [0, 96], sizes = [8, 32], strides = [1, 1]} : vector<8x128xf32> to vector<8x32xf32>
    %336 = arith.mulf %333, %312 : vector<8x32xf32>
    %337 = arith.mulf %332, %334 : vector<8x32xf32>
    %338 = arith.addf %336, %337 : vector<8x32xf32>
    %339 = math.tanh %338 : vector<8x32xf32>
    %340 = arith.mulf %335, %339 : vector<8x32xf32>
    %341 = arith.index_cast %c4_i32_89 : i32 to index
    %c0_94 = arith.constant 0 : index
    %c0_95 = arith.constant 0 : index
    %342 = vector.load %arg8[%341, %c0_94, %c0_95] : memref<8x8x32xf32, #tpu.memory_space<vmem>>, vector<1x8x32xf32>
    %343 = vector.shape_cast %342 : vector<1x8x32xf32> to vector<8x32xf32>
    %344 = vector.shape_cast %340 : vector<8x32xf32> to vector<1x8x32xf32>
    tpu.vector_store %arg8[%341, %c0_94, %c0_95], %344 {strides = array<i32>} : memref<8x8x32xf32, #tpu.memory_space<vmem>>, vector<1x8x32xf32>,
    %c5_i32_96 = arith.constant 5 : i32
    %c8_i32_97 = arith.constant 8 : i32
    %345 = arith.muli %c5_i32_96, %c8_i32_97 : i32
    %346 = tpu.assume_multiple %345, 8 : i32
    %347 = arith.index_cast %346 : i32 to index
    %c0_98 = arith.constant 0 : index
    %348 = vector.load %arg9[%347, %c0_98] : memref<64x128xf32, #tpu.memory_space<vmem>>, vector<8x128xf32>
    %cst_99 = arith.constant dense<0.000000e+00> : vector<8x128xf32>
    %349 = tpu.matmul %340, %214, %cst_99 {dimension_numbers = #tpu.dot_dimension_numbers<[1], [0], [0], [1], [0, 0, 1, 1], [], []>} : vector<8x32xf32>, vector<32x128xf32>, vector<8x128xf32> -> vector<8x128xf32>
    %350 = arith.addf %348, %349 : vector<8x128xf32>
    %351 = arith.negf %350 : vector<8x128xf32>
    %352 = math.exp %351 : vector<8x128xf32>
    %cst_100 = arith.constant 1.000000e+00 : f32
    %353 = vector.broadcast %cst_100 : f32 to vector<8x128xf32>
    %354 = arith.addf %353, %352 : vector<8x128xf32>
    %355 = arith.divf %353, %354 : vector<8x128xf32>
    %356 = math.tanh %350 : vector<8x128xf32>
    %357 = arith.select %5, %356, %355 : vector<8x128xi1>, vector<8x128xf32>
    %358 = vector.extract_strided_slice %357 {offsets = [0, 0], sizes = [8, 32], strides = [1, 1]} : vector<8x128xf32> to vector<8x32xf32>
    %359 = vector.extract_strided_slice %357 {offsets = [0, 32], sizes = [8, 32], strides = [1, 1]} : vector<8x128xf32> to vector<8x32xf32>
    %360 = vector.extract_strided_slice %357 {offsets = [0, 64], sizes = [8, 32], strides = [1, 1]} : vector<8x128xf32> to vector<8x32xf32>
    %361 = vector.extract_strided_slice %357 {offsets = [0, 96], sizes = [8, 32], strides = [1, 1]} : vector<8x128xf32> to vector<8x32xf32>
    %362 = arith.mulf %359, %338 : vector<8x32xf32>
    %363 = arith.mulf %358, %360 : vector<8x32xf32>
    %364 = arith.addf %362, %363 : vector<8x32xf32>
    %365 = math.tanh %364 : vector<8x32xf32>
    %366 = arith.mulf %361, %365 : vector<8x32xf32>
    %367 = arith.index_cast %c5_i32_96 : i32 to index
    %c0_101 = arith.constant 0 : index
    %c0_102 = arith.constant 0 : index
    %368 = vector.load %arg8[%367, %c0_101, %c0_102] : memref<8x8x32xf32, #tpu.memory_space<vmem>>, vector<1x8x32xf32>
    %369 = vector.shape_cast %368 : vector<1x8x32xf32> to vector<8x32xf32>
    %370 = vector.shape_cast %366 : vector<8x32xf32> to vector<1x8x32xf32>
    tpu.vector_store %arg8[%367, %c0_101, %c0_102], %370 {strides = array<i32>} : memref<8x8x32xf32, #tpu.memory_space<vmem>>, vector<1x8x32xf32>,
    %c6_i32_103 = arith.constant 6 : i32
    %c8_i32_104 = arith.constant 8 : i32
    %371 = arith.muli %c6_i32_103, %c8_i32_104 : i32
    %372 = tpu.assume_multiple %371, 8 : i32
    %373 = arith.index_cast %372 : i32 to index
    %c0_105 = arith.constant 0 : index
    %374 = vector.load %arg9[%373, %c0_105] : memref<64x128xf32, #tpu.memory_space<vmem>>, vector<8x128xf32>
    %cst_106 = arith.constant dense<0.000000e+00> : vector<8x128xf32>
    %375 = tpu.matmul %366, %214, %cst_106 {dimension_numbers = #tpu.dot_dimension_numbers<[1], [0], [0], [1], [0, 0, 1, 1], [], []>} : vector<8x32xf32>, vector<32x128xf32>, vector<8x128xf32> -> vector<8x128xf32>
    %376 = arith.addf %374, %375 : vector<8x128xf32>
    %377 = arith.negf %376 : vector<8x128xf32>
    %378 = math.exp %377 : vector<8x128xf32>
    %cst_107 = arith.constant 1.000000e+00 : f32
    %379 = vector.broadcast %cst_107 : f32 to vector<8x128xf32>
    %380 = arith.addf %379, %378 : vector<8x128xf32>
    %381 = arith.divf %379, %380 : vector<8x128xf32>
    %382 = math.tanh %376 : vector<8x128xf32>
    %383 = arith.select %5, %382, %381 : vector<8x128xi1>, vector<8x128xf32>
    %384 = vector.extract_strided_slice %383 {offsets = [0, 0], sizes = [8, 32], strides = [1, 1]} : vector<8x128xf32> to vector<8x32xf32>
    %385 = vector.extract_strided_slice %383 {offsets = [0, 32], sizes = [8, 32], strides = [1, 1]} : vector<8x128xf32> to vector<8x32xf32>
    %386 = vector.extract_strided_slice %383 {offsets = [0, 64], sizes = [8, 32], strides = [1, 1]} : vector<8x128xf32> to vector<8x32xf32>
    %387 = vector.extract_strided_slice %383 {offsets = [0, 96], sizes = [8, 32], strides = [1, 1]} : vector<8x128xf32> to vector<8x32xf32>
    %388 = arith.mulf %385, %364 : vector<8x32xf32>
    %389 = arith.mulf %384, %386 : vector<8x32xf32>
    %390 = arith.addf %388, %389 : vector<8x32xf32>
    %391 = math.tanh %390 : vector<8x32xf32>
    %392 = arith.mulf %387, %391 : vector<8x32xf32>
    %393 = arith.index_cast %c6_i32_103 : i32 to index
    %c0_108 = arith.constant 0 : index
    %c0_109 = arith.constant 0 : index
    %394 = vector.load %arg8[%393, %c0_108, %c0_109] : memref<8x8x32xf32, #tpu.memory_space<vmem>>, vector<1x8x32xf32>
    %395 = vector.shape_cast %394 : vector<1x8x32xf32> to vector<8x32xf32>
    %396 = vector.shape_cast %392 : vector<8x32xf32> to vector<1x8x32xf32>
    tpu.vector_store %arg8[%393, %c0_108, %c0_109], %396 {strides = array<i32>} : memref<8x8x32xf32, #tpu.memory_space<vmem>>, vector<1x8x32xf32>,
    %c7_i32_110 = arith.constant 7 : i32
    %c8_i32_111 = arith.constant 8 : i32
    %397 = arith.muli %c7_i32_110, %c8_i32_111 : i32
    %398 = tpu.assume_multiple %397, 8 : i32
    %399 = arith.index_cast %398 : i32 to index
    %c0_112 = arith.constant 0 : index
    %400 = vector.load %arg9[%399, %c0_112] : memref<64x128xf32, #tpu.memory_space<vmem>>, vector<8x128xf32>
    %cst_113 = arith.constant dense<0.000000e+00> : vector<8x128xf32>
    %401 = tpu.matmul %392, %214, %cst_113 {dimension_numbers = #tpu.dot_dimension_numbers<[1], [0], [0], [1], [0, 0, 1, 1], [], []>} : vector<8x32xf32>, vector<32x128xf32>, vector<8x128xf32> -> vector<8x128xf32>
    %402 = arith.addf %400, %401 : vector<8x128xf32>
    %403 = arith.negf %402 : vector<8x128xf32>
    %404 = math.exp %403 : vector<8x128xf32>
    %cst_114 = arith.constant 1.000000e+00 : f32
    %405 = vector.broadcast %cst_114 : f32 to vector<8x128xf32>
    %406 = arith.addf %405, %404 : vector<8x128xf32>
    %407 = arith.divf %405, %406 : vector<8x128xf32>
    %408 = math.tanh %402 : vector<8x128xf32>
    %409 = arith.select %5, %408, %407 : vector<8x128xi1>, vector<8x128xf32>
    %410 = vector.extract_strided_slice %409 {offsets = [0, 0], sizes = [8, 32], strides = [1, 1]} : vector<8x128xf32> to vector<8x32xf32>
    %411 = vector.extract_strided_slice %409 {offsets = [0, 32], sizes = [8, 32], strides = [1, 1]} : vector<8x128xf32> to vector<8x32xf32>
    %412 = vector.extract_strided_slice %409 {offsets = [0, 64], sizes = [8, 32], strides = [1, 1]} : vector<8x128xf32> to vector<8x32xf32>
    %413 = vector.extract_strided_slice %409 {offsets = [0, 96], sizes = [8, 32], strides = [1, 1]} : vector<8x128xf32> to vector<8x32xf32>
    %414 = arith.mulf %411, %390 : vector<8x32xf32>
    %415 = arith.mulf %410, %412 : vector<8x32xf32>
    %416 = arith.addf %414, %415 : vector<8x32xf32>
    %417 = math.tanh %416 : vector<8x32xf32>
    %418 = arith.mulf %413, %417 : vector<8x32xf32>
    %419 = arith.index_cast %c7_i32_110 : i32 to index
    %c0_115 = arith.constant 0 : index
    %c0_116 = arith.constant 0 : index
    %420 = vector.load %arg8[%419, %c0_115, %c0_116] : memref<8x8x32xf32, #tpu.memory_space<vmem>>, vector<1x8x32xf32>
    %421 = vector.shape_cast %420 : vector<1x8x32xf32> to vector<8x32xf32>
    %422 = vector.shape_cast %418 : vector<8x32xf32> to vector<1x8x32xf32>
    tpu.vector_store %arg8[%419, %c0_115, %c0_116], %422 {strides = array<i32>} : memref<8x8x32xf32, #tpu.memory_space<vmem>>, vector<1x8x32xf32>,
    %c8_i32_117 = arith.constant 8 : i32
    return
  }
  func.func @transform_0(%arg0: i32) -> (i32, i32) {
    %c0_i32 = arith.constant 0 : i32
    %c0_i32_0 = arith.constant 0 : i32
    %c0_i32_1 = arith.constant 0 : i32
    return %c0_i32, %c0_i32_0 : i32, i32
  }
  func.func @transform_1(%arg0: i32) -> (i32, i32) {
    %c0_i32 = arith.constant 0 : i32
    %c0_i32_0 = arith.constant 0 : i32
    %c0_i32_1 = arith.constant 0 : i32
    return %c0_i32, %c0_i32_0 : i32, i32
  }
  func.func @transform_2(%arg0: i32) -> (i32, i32) {
    %c0_i32 = arith.constant 0 : i32
    %c0_i32_0 = arith.constant 0 : i32
    %c0_i32_1 = arith.constant 0 : i32
    return %c0_i32, %c0_i32_0 : i32, i32
  }
  func.func @transform_3(%arg0: i32) -> (i32, i32) {
    %c0_i32 = arith.constant 0 : i32
    %c0_i32_0 = arith.constant 0 : i32
    %c0_i32_1 = arith.constant 0 : i32
    return %c0_i32, %c0_i32_0 : i32, i32
  }
  func.func @transform_4(%arg0: i32) -> (i32, i32) {
    %c0_i32 = arith.constant 0 : i32
    %c0_i32_0 = arith.constant 0 : i32
    %c0_i32_1 = arith.constant 0 : i32
    return %c0_i32, %c0_i32_0 : i32, i32
  }
  func.func @transform_5(%arg0: i32) -> (i32, i32) {
    %c0_i32 = arith.constant 0 : i32
    %c0_i32_0 = arith.constant 0 : i32
    %c0_i32_1 = arith.constant 0 : i32
    return %c0_i32, %c0_i32_0 : i32, i32
  }
  func.func @transform_6(%arg0: i32) -> (i32, i32) {
    %c0_i32 = arith.constant 0 : i32
    %c0_i32_0 = arith.constant 0 : i32
    %c0_i32_1 = arith.constant 0 : i32
    return %c0_i32, %c0_i32_0 : i32, i32
  }
  func.func @transform_7(%arg0: i32) -> (i32, i32, i32) {
    %c0_i32 = arith.constant 0 : i32
    %c0_i32_0 = arith.constant 0 : i32
    %c0_i32_1 = arith.constant 0 : i32
    %c0_i32_2 = arith.constant 0 : i32
    return %c0_i32, %c0_i32_0, %c0_i32_1 : i32, i32, i32
  }
}

</mosaic_0001>

<llo_original>
// kernel: tpu_custom_call.1
$region0: #{tpu_custom_call.1}
  #allocation0 [shape = 'u32[]', space=smem, size = 0x4, offset = 0x4, fixed_abs, tag = 'smem constant byte address 0x4 - core index']
  #allocation1 [shape = 'u32[72,128]{1,0:T(1,128)}', space=vmem, size = 0x9000, scoped, tag = 'internal scratch']
  #allocation2 [shape = 'f32[64,128]{1,0:T(8,128)}', space=vmem, size = 0x8000, scoped, tag = 'scratch operand']
  #allocation3 [shape = 'f32[64,32]{1,0:T(8,128)}', space=vmem, size = 0x8000, scoped, tag = 'scratch operand']
  %s0 = inlined_call_operand.vmem [shape: f32[64,10], index: 0, kind: input, shape index: {}]
  %s1 = inlined_call_operand.vmem [shape: f32[10,128], index: 1, kind: input, shape index: {}]
  %s2 = inlined_call_operand.vmem [shape: f32[32,128], index: 2, kind: input, shape index: {}]
  %s3 = inlined_call_operand.vmem [shape: f32[1,128], index: 3, kind: input, shape index: {}]
  %s4 = inlined_call_operand.vmem [shape: f32[32,128], index: 4, kind: input, shape index: {}]
  %s5 = inlined_call_operand.hbm [shape: f32[32,128], index: 5, kind: input, shape index: {}]
  %s6 = inlined_call_operand.vmem [shape: f32[1,128], index: 6, kind: input, shape index: {}]
  %s7 = inlined_call_operand.hbm [shape: f32[8,8,32], index: 7, kind: output, shape index: {}]
  %s8 = sld [smem:[#allocation0]]
  $region42: #{tpu_custom_call.1} parent=0
    _
  %s10 = ssub.s32 1, %s8
  %s11 = scalar_select 0, %s10, %s8
  $region1: #{tpu_custom_call.1} parent=0
    #allocation4 [shape = 'u8[16384]{0}', space=vmem, size = 0x4000, scoped, tag = 'input window, operand 5, single buffered']
    #allocation5 [shape = 's32[1]{0}', space=sflag, size = 0x4, scoped, tag = 'scoped memory for tpu_custom_call.1']
    #allocation6 [shape = 's32[1]{0}', space=sflag, size = 0x4, scoped, tag = 'scoped memory for tpu_custom_call.1']
    #allocation7 [shape = 'u8[32768]{0}', space=vmem, size = 0x8000, scoped, tag = 'output window, operand 0, single buffered']
    %12 = vsyncpa [#allocation5], 0
    %13 = vsyncpa [#allocation6], 0
    // Predicated region
    $region2: #{tpu_custom_call.1} parent=1 // pred_check
      _
    $region3: #{tpu_custom_call.1} parent=1 // pred_check_branch
      %15 = sbr.rel (0) target = $region5
    $region4: #{tpu_custom_call.1} parent=1 // pred_region
      _
    $region5: #{tpu_custom_call.1} parent=1 // pred_fallthru
      _
    // Predicated region
    $region6: #{tpu_custom_call.1} parent=1 // pred_check
      _
    $region7: #{tpu_custom_call.1} parent=1 // pred_check_branch
      %17 = sbr.rel (0) target = $region9
    $region8: #{tpu_custom_call.1} parent=1 // pred_region
      _
    $region9: #{tpu_custom_call.1} parent=1 // pred_fallthru
      _
    // Predicated region
    $region10: #{tpu_custom_call.1} parent=1 // pred_check
      _
    $region11: #{tpu_custom_call.1} parent=1 // pred_check_branch
      %19 = sbr.rel (0) target = $region13
    $region12: #{tpu_custom_call.1} parent=1 // pred_region
      _
    $region13: #{tpu_custom_call.1} parent=1 // pred_fallthru
      _
    // Predicated region
    $region14: #{tpu_custom_call.1} parent=1 // pred_check
      _
    $region15: #{tpu_custom_call.1} parent=1 // pred_check_branch
      %21 = sbr.rel (0) target = $region17
    $region16: #{tpu_custom_call.1} parent=1 // pred_region
      _
    $region17: #{tpu_custom_call.1} parent=1 // pred_fallthru
      _
    // Predicated region
    $region18: #{tpu_custom_call.1} parent=1 // pred_check
      _
    $region19: #{tpu_custom_call.1} parent=1 // pred_check_branch
      %23 = sbr.rel (0) target = $region21
    $region20: #{tpu_custom_call.1} parent=1 // pred_region
      _
    $region21: #{tpu_custom_call.1} parent=1 // pred_fallthru
      _
    // Predicated region
    $region22: #{tpu_custom_call.1} parent=1 // pred_check
      _
    $region23: #{tpu_custom_call.1} parent=1 // pred_check_branch
      %25 = sbr.rel (0) target = $region25
    $region24: #{tpu_custom_call.1} parent=1 // pred_region
      %27 = vsyncadd [#allocation5], 0
      %s28 = sshll.u32 %s5, 4
      %s29 = int_to_ptr.hbm [resolvable:$true] %s28
      %s30 = sshll.u32 [#allocation4], 4
      %s31 = int_to_ptr.vmem [resolvable:$true] %s30
      %36 = dma.hbm_to_vmem [thread:$0]  %s29, 512, %s31, [#allocation5], 128, 128, 8
    $region25: #{tpu_custom_call.1} parent=1 // pred_fallthru
      _
    // Predicated region
    $region26: #{tpu_custom_call.1} parent=1 // pred_check
      _
    $region27: #{tpu_custom_call.1} parent=1 // pred_check_branch
      %38 = sbr.rel (0) target = $region29
    $region28: #{tpu_custom_call.1} parent=1 // pred_region
      _
    $region29: #{tpu_custom_call.1} parent=1 // pred_fallthru
      _
    // Predicated region
    $region30: #{tpu_custom_call.1} parent=1 // pred_check
      _
    $region31: #{tpu_custom_call.1} parent=1 // pred_check_branch
      %40 = sbr.rel (0) target = $region33
    $region32: #{tpu_custom_call.1} parent=1 // pred_region
      %42 = dma.done [#allocation5], 512
    $region33: #{tpu_custom_call.1} parent=1 // pred_fallthru
      _
    %v43 = vlaneseq
    %v44 = vand.u32 %v43, 127
    %vm45 = vcmp.ge.s32.totalorder %v44, 64
    %vm46 = vcmp.lt.s32.totalorder %v44, 96
    %vm47 = vmand %vm45, %vm46
    %v48 = vld [vmem:[%s0] sm:$0xff]
    %v49 = vld [vmem:[%s0 + $0x8] sm:$0xff]
    %v50 = vld [vmem:[%s0 + $0x10] sm:$0xff]
    %v51 = vld [vmem:[%s0 + $0x18] sm:$0xff]
    %v52 = vld [vmem:[%s0 + $0x20] sm:$0xff]
    %v53 = vld [vmem:[%s0 + $0x28] sm:$0xff]
    %v54 = vld [vmem:[%s0 + $0x30] sm:$0xff]
    %v55 = vld [vmem:[%s0 + $0x38] sm:$0xff]
    %v56 = vld [vmem:[%s1] sm:$0xff]
    %v57 = vld [vmem:[%s1 + $0x8] sm:$0x3]
    %v58 = vld [vmem:[%s3] sm:$0x1]
    %v60 = vperm.slane %v58, 0
    %vm62 = vcmask 80896
    %v64 = vsel %vm62, %v48, 0
    %v67 = vsel %vm62, %v49, 0
    %v70 = vsel %vm62, %v50, 0
    %v73 = vsel %vm62, %v51, 0
    %v76 = vsel %vm62, %v52, 0
    %v79 = vsel %vm62, %v53, 0
    %v82 = vsel %vm62, %v54, 0
    %v85 = vsel %vm62, %v55, 0
    %vm87 = vcmask 1041408
    %v89 = vsel %vm87, %v57, 0
    %91 = vmatpush.msra.mxu0 0.0
    %92 = vmatpush.msra.mxu0 0.0
    %93 = vmatpush.msra.mxu0 0.0
    %94 = vmatpush.msra.mxu0 0.0
    %95 = vmatpush.msra.mxu0 0.0
    %96 = vmatpush.msra.mxu0 0.0
    %97 = vmatpush.msra.mxu0 0.0
    %98 = vmatpush.msra.mxu0 0.0
    %99 = vmatpush.msra.mxu0 0.0
    %100 = vmatpush.msra.mxu0 0.0
    %101 = vmatpush.msra.mxu0 0.0
    %102 = vmatpush.msra.mxu0 0.0
    %103 = vmatpush.msra.mxu0 0.0
    %104 = vmatpush.msra.mxu0 0.0
    %105 = vmatpush.msra.mxu0 %v89
    %106 = vmatpush.msra.mxu0 %v56
    %107 = vmatmul.f32.gmra.mxu0 %v64
    %v108 = vpop.f32.mrf.mxu0
    %v109 = vadd.f32 %v60, %v108
    %110 = vmatmul.f32.gmra.mxu0 %v67
    %v111 = vpop.f32.mrf.mxu0
    %v112 = vadd.f32 %v60, %v111
    %113 = vmatmul.f32.gmra.mxu0 %v70
    %v114 = vpop.f32.mrf.mxu0
    %v115 = vadd.f32 %v60, %v114
    %116 = vmatmul.f32.gmra.mxu0 %v73
    %v117 = vpop.f32.mrf.mxu0
    %v118 = vadd.f32 %v60, %v117
    %119 = vmatmul.f32.gmra.mxu0 %v76
    %v120 = vpop.f32.mrf.mxu0
    %v121 = vadd.f32 %v60, %v120
    %122 = vmatmul.f32.gmra.mxu0 %v79
    %v123 = vpop.f32.mrf.mxu0
    %v124 = vadd.f32 %v60, %v123
    %125 = vmatmul.f32.gmra.mxu0 %v82
    %v126 = vpop.f32.mrf.mxu0
    %v127 = vadd.f32 %v60, %v126
    %128 = vmatmul.f32.gmra.mxu0 %v85
    %v129 = vpop.f32.mrf.mxu0
    %v130 = vadd.f32 %v60, %v129
    %131 = vdwg.mxu0
    %132 = vst [vmem:[#allocation2] sm:$0xff] %v109
    %133 = vst [vmem:[#allocation2 + $0x8] sm:$0xff] %v112
    %134 = vst [vmem:[#allocation2 + $0x10] sm:$0xff] %v115
    %135 = vst [vmem:[#allocation2 + $0x18] sm:$0xff] %v118
    %136 = vst [vmem:[#allocation2 + $0x20] sm:$0xff] %v121
    %137 = vst [vmem:[#allocation2 + $0x28] sm:$0xff] %v124
    %138 = vst [vmem:[#allocation2 + $0x30] sm:$0xff] %v127
    %139 = vst [vmem:[#allocation2 + $0x38] sm:$0xff] %v130
    %v140 = vld [vmem:[%s2] sm:$0xff]
    %v141 = vld [vmem:[%s2 + $0x8] sm:$0xff]
    %v142 = vld [vmem:[%s2 + $0x10] sm:$0xff]
    %v143 = vld [vmem:[%s2 + $0x18] sm:$0xff]
    %v144 = vld [vmem:[#allocation2] sm:$0xff]
    %vm145 = vcmask 261120
    %v147 = vsel %vm145, 0.0, 0
    %149 = vmatpush.msra.mxu0 0.0
    %150 = vmatpush.msra.mxu0 0.0
    %151 = vmatpush.msra.mxu0 0.0
    %152 = vmatpush.msra.mxu0 0.0
    %153 = vmatpush.msra.mxu0 0.0
    %154 = vmatpush.msra.mxu0 0.0
    %155 = vmatpush.msra.mxu0 0.0
    %156 = vmatpush.msra.mxu0 0.0
    %157 = vmatpush.msra.mxu0 0.0
    %158 = vmatpush.msra.mxu0 0.0
    %159 = vmatpush.msra.mxu0 0.0
    %160 = vmatpush.msra.mxu0 0.0
    %161 = vmatpush.msra.mxu0 %v143
    %162 = vmatpush.msra.mxu0 %v142
    %163 = vmatpush.msra.mxu0 %v141
    %164 = vmatpush.msra.mxu0 %v140
    %165 = vmatmul.f32.gmra.mxu0 %v147
    %v166 = vpop.f32.mrf.mxu0
    %v167 = vadd.f32 0.0, %v166
    %168 = vdwg.mxu0
    %v169 = vadd.f32 %v144, %v167
    %v170 = vxor.u32 %v169, 2147483648
    %v171 = vmul.f32 %v170, 1.442695
    %v172 = vpow.pop %v171
    %v173 = vadd.f32 %v172, 1.0
    %v174 = vrcp.pop %v173
    %v175 = vmul.f32 %v173, %v174
    %v176 = vsub.f32 1.0, %v175
    %v177 = vmul.f32 %v174, %v176
    %v178 = vadd.f32 %v174, %v177
    %vm179 = vweird.f32 %v173
    %vm180 = vweird.f32 %v174
    %vm181 = vmor %vm179, %vm180
    %v182 = vsel %vm181, %v174, %v178
    %v183 = vand.u32 2147483647, %v173
    %vm184 = vcmp.eq.f32.partialorder %v183, 8.507059e+37
    %v185 = vand.u32 %v173, 2147483648
    %v186 = vor.u32 1.1754944e-38, %v185
    %v187 = vsel %vm184, %v186, %v182
    %v188 = vmul.f32 1.0, %v187
    %v189 = vtanh.pop %v169
    %v190 = vsel %vm47, %v189, %v188
    %v191 = vmul.f32 %v190, 0.0
    %193 = vrot.lane.b32.xlu0 %v190, 64
    %v194 = vpop.permute.xlu0 %193
    %v196 = vmul.f32 %v190, %v194
    %198 = vrot.lane.b32.xlu0 %v196, 32
    %v199 = vpop.permute.xlu0 %198
    %v201 = vadd.f32 %v191, %v199
    %v202 = vtanh.pop %v201
    %204 = vrot.lane.b32.xlu0 %v202, 64
    %v205 = vpop.permute.xlu0 %204
    %v207 = vmul.f32 %v190, %v205
    %209 = vrot.lane.b32.xlu0 %v207, 32
    %v210 = vpop.permute.xlu0 %209
    %212 = vst.msk [vmem:[#allocation3] sm:$0xff] %vm145, %v210
    %s213 = scalar_lea.vmem [#allocation2], 8
    %v214 = vld [vmem:[%s213] sm:$0xff]
    %v215 = vsel %vm145, %v210, 0
    %217 = vmatpush.msra.mxu0 0.0
    %218 = vmatpush.msra.mxu0 0.0
    %219 = vmatpush.msra.mxu0 0.0
    %220 = vmatpush.msra.mxu0 0.0
    %221 = vmatpush.msra.mxu0 0.0
    %222 = vmatpush.msra.mxu0 0.0
    %223 = vmatpush.msra.mxu0 0.0
    %224 = vmatpush.msra.mxu0 0.0
    %225 = vmatpush.msra.mxu0 0.0
    %226 = vmatpush.msra.mxu0 0.0
    %227 = vmatpush.msra.mxu0 0.0
    %228 = vmatpush.msra.mxu0 0.0
    %229 = vmatpush.msra.mxu0 %v143
    %230 = vmatpush.msra.mxu0 %v142
    %231 = vmatpush.msra.mxu0 %v141
    %232 = vmatpush.msra.mxu0 %v140
    %233 = vmatmul.f32.gmra.mxu0 %v215
    %v234 = vpop.f32.mrf.mxu0
    %v235 = vadd.f32 0.0, %v234
    %236 = vdwg.mxu0
    %v237 = vadd.f32 %v214, %v235
    %v238 = vxor.u32 %v237, 2147483648
    %v239 = vmul.f32 %v238, 1.442695
    %v240 = vpow.pop %v239
    %v241 = vadd.f32 %v240, 1.0
    %v242 = vrcp.pop %v241
    %v243 = vmul.f32 %v241, %v242
    %v244 = vsub.f32 1.0, %v243
    %v245 = vmul.f32 %v242, %v244
    %v246 = vadd.f32 %v242, %v245
    %vm247 = vweird.f32 %v241
    %vm248 = vweird.f32 %v242
    %vm249 = vmor %vm247, %vm248
    %v250 = vsel %vm249, %v242, %v246
    %v251 = vand.u32 2147483647, %v241
    %vm252 = vcmp.eq.f32.partialorder %v251, 8.507059e+37
    %v253 = vand.u32 %v241, 2147483648
    %v254 = vor.u32 1.1754944e-38, %v253
    %v255 = vsel %vm252, %v254, %v250
    %v256 = vmul.f32 1.0, %v255
    %v257 = vtanh.pop %v237
    %v258 = vsel %vm47, %v257, %v256
    %v259 = vmul.f32 %v258, %v201
    %261 = vrot.lane.b32.xlu0 %v258, 64
    %v262 = vpop.permute.xlu0 %261
    %v264 = vmul.f32 %v258, %v262
    %266 = vrot.lane.b32.xlu0 %v264, 32
    %v267 = vpop.permute.xlu0 %266
    %v269 = vadd.f32 %v259, %v267
    %v270 = vtanh.pop %v269
    %272 = vrot.lane.b32.xlu0 %v270, 64
    %v273 = vpop.permute.xlu0 %272
    %v275 = vmul.f32 %v258, %v273
    %277 = vrot.lane.b32.xlu0 %v275, 32
    %v278 = vpop.permute.xlu0 %277
    %s280 = scalar_lea.vmem [#allocation3], 8
    %281 = vst.msk [vmem:[%s280] sm:$0xff] %vm145, %v278
    %s282 = scalar_lea.vmem [#allocation2], 16
    %v283 = vld [vmem:[%s282] sm:$0xff]
    %v284 = vsel %vm145, %v278, 0
    %286 = vmatpush.msra.mxu0 0.0
    %287 = vmatpush.msra.mxu0 0.0
    %288 = vmatpush.msra.mxu0 0.0
    %289 = vmatpush.msra.mxu0 0.0
    %290 = vmatpush.msra.mxu0 0.0
    %291 = vmatpush.msra.mxu0 0.0
    %292 = vmatpush.msra.mxu0 0.0
    %293 = vmatpush.msra.mxu0 0.0
    %294 = vmatpush.msra.mxu0 0.0
    %295 = vmatpush.msra.mxu0 0.0
    %296 = vmatpush.msra.mxu0 0.0
    %297 = vmatpush.msra.mxu0 0.0
    %298 = vmatpush.msra.mxu0 %v143
    %299 = vmatpush.msra.mxu0 %v142
    %300 = vmatpush.msra.mxu0 %v141
    %301 = vmatpush.msra.mxu0 %v140
    %302 = vmatmul.f32.gmra.mxu0 %v284
    %v303 = vpop.f32.mrf.mxu0
    %v304 = vadd.f32 0.0, %v303
    %305 = vdwg.mxu0
    %v306 = vadd.f32 %v283, %v304
    %v307 = vxor.u32 %v306, 2147483648
    %v308 = vmul.f32 %v307, 1.442695
    %v309 = vpow.pop %v308
    %v310 = vadd.f32 %v309, 1.0
    %v311 = vrcp.pop %v310
    %v312 = vmul.f32 %v310, %v311
    %v313 = vsub.f32 1.0, %v312
    %v314 = vmul.f32 %v311, %v313
    %v315 = vadd.f32 %v311, %v314
    %vm316 = vweird.f32 %v310
    %vm317 = vweird.f32 %v311
    %vm318 = vmor %vm316, %vm317
    %v319 = vsel %vm318, %v311, %v315
    %v320 = vand.u32 2147483647, %v310
    %vm321 = vcmp.eq.f32.partialorder %v320, 8.507059e+37
    %v322 = vand.u32 %v310, 2147483648
    %v323 = vor.u32 1.1754944e-38, %v322
    %v324 = vsel %vm321, %v323, %v319
    %v325 = vmul.f32 1.0, %v324
    %v326 = vtanh.pop %v306
    %v327 = vsel %vm47, %v326, %v325
    %v328 = vmul.f32 %v327, %v269
    %330 = vrot.lane.b32.xlu0 %v327, 64
    %v331 = vpop.permute.xlu0 %330
    %v333 = vmul.f32 %v327, %v331
    %335 = vrot.lane.b32.xlu0 %v333, 32
    %v336 = vpop.permute.xlu0 %335
    %v338 = vadd.f32 %v328, %v336
    %v339 = vtanh.pop %v338
    %341 = vrot.lane.b32.xlu0 %v339, 64
    %v342 = vpop.permute.xlu0 %341
    %v344 = vmul.f32 %v327, %v342
    %346 = vrot.lane.b32.xlu0 %v344, 32
    %v347 = vpop.permute.xlu0 %346
    %s349 = scalar_lea.vmem [#allocation3], 16
    %350 = vst.msk [vmem:[%s349] sm:$0xff] %vm145, %v347
    %s351 = scalar_lea.vmem [#allocation2], 24
    %v352 = vld [vmem:[%s351] sm:$0xff]
    %v353 = vsel %vm145, %v347, 0
    %355 = vmatpush.msra.mxu0 0.0
    %356 = vmatpush.msra.mxu0 0.0
    %357 = vmatpush.msra.mxu0 0.0
    %358 = vmatpush.msra.mxu0 0.0
    %359 = vmatpush.msra.mxu0 0.0
    %360 = vmatpush.msra.mxu0 0.0
    %361 = vmatpush.msra.mxu0 0.0
    %362 = vmatpush.msra.mxu0 0.0
    %363 = vmatpush.msra.mxu0 0.0
    %364 = vmatpush.msra.mxu0 0.0
    %365 = vmatpush.msra.mxu0 0.0
    %366 = vmatpush.msra.mxu0 0.0
    %367 = vmatpush.msra.mxu0 %v143
    %368 = vmatpush.msra.mxu0 %v142
    %369 = vmatpush.msra.mxu0 %v141
    %370 = vmatpush.msra.mxu0 %v140
    %371 = vmatmul.f32.gmra.mxu0 %v353
    %v372 = vpop.f32.mrf.mxu0
    %v373 = vadd.f32 0.0, %v372
    %374 = vdwg.mxu0
    %v375 = vadd.f32 %v352, %v373
    %v376 = vxor.u32 %v375, 2147483648
    %v377 = vmul.f32 %v376, 1.442695
    %v378 = vpow.pop %v377
    %v379 = vadd.f32 %v378, 1.0
    %v380 = vrcp.pop %v379
    %v381 = vmul.f32 %v379, %v380
    %v382 = vsub.f32 1.0, %v381
    %v383 = vmul.f32 %v380, %v382
    %v384 = vadd.f32 %v380, %v383
    %vm385 = vweird.f32 %v379
    %vm386 = vweird.f32 %v380
    %vm387 = vmor %vm385, %vm386
    %v388 = vsel %vm387, %v380, %v384
    %v389 = vand.u32 2147483647, %v379
    %vm390 = vcmp.eq.f32.partialorder %v389, 8.507059e+37
    %v391 = vand.u32 %v379, 2147483648
    %v392 = vor.u32 1.1754944e-38, %v391
    %v393 = vsel %vm390, %v392, %v388
    %v394 = vmul.f32 1.0, %v393
    %v395 = vtanh.pop %v375
    %v396 = vsel %vm47, %v395, %v394
    %v397 = vmul.f32 %v396, %v338
    %399 = vrot.lane.b32.xlu0 %v396, 64
    %v400 = vpop.permute.xlu0 %399
    %v402 = vmul.f32 %v396, %v400
    %404 = vrot.lane.b32.xlu0 %v402, 32
    %v405 = vpop.permute.xlu0 %404
    %v407 = vadd.f32 %v397, %v405
    %v408 = vtanh.pop %v407
    %410 = vrot.lane.b32.xlu0 %v408, 64
    %v411 = vpop.permute.xlu0 %410
    %v413 = vmul.f32 %v396, %v411
    %415 = vrot.lane.b32.xlu0 %v413, 32
    %v416 = vpop.permute.xlu0 %415
    %s418 = scalar_lea.vmem [#allocation3], 24
    %419 = vst.msk [vmem:[%s418] sm:$0xff] %vm145, %v416
    %s420 = scalar_lea.vmem [#allocation2], 32
    %v421 = vld [vmem:[%s420] sm:$0xff]
    %v422 = vsel %vm145, %v416, 0
    %424 = vmatpush.msra.mxu0 0.0
    %425 = vmatpush.msra.mxu0 0.0
    %426 = vmatpush.msra.mxu0 0.0
    %427 = vmatpush.msra.mxu0 0.0
    %428 = vmatpush.msra.mxu0 0.0
    %429 = vmatpush.msra.mxu0 0.0
    %430 = vmatpush.msra.mxu0 0.0
    %431 = vmatpush.msra.mxu0 0.0
    %432 = vmatpush.msra.mxu0 0.0
    %433 = vmatpush.msra.mxu0 0.0
    %434 = vmatpush.msra.mxu0 0.0
    %435 = vmatpush.msra.mxu0 0.0
    %436 = vmatpush.msra.mxu0 %v143
    %437 = vmatpush.msra.mxu0 %v142
    %438 = vmatpush.msra.mxu0 %v141
    %439 = vmatpush.msra.mxu0 %v140
    %440 = vmatmul.f32.gmra.mxu0 %v422
    %v441 = vpop.f32.mrf.mxu0
    %v442 = vadd.f32 0.0, %v441
    %443 = vdwg.mxu0
    %v444 = vadd.f32 %v421, %v442
    %v445 = vxor.u32 %v444, 2147483648
    %v446 = vmul.f32 %v445, 1.442695
    %v447 = vpow.pop %v446
    %v448 = vadd.f32 %v447, 1.0
    %v449 = vrcp.pop %v448
    %v450 = vmul.f32 %v448, %v449
    %v451 = vsub.f32 1.0, %v450
    %v452 = vmul.f32 %v449, %v451
    %v453 = vadd.f32 %v449, %v452
    %vm454 = vweird.f32 %v448
    %vm455 = vweird.f32 %v449
    %vm456 = vmor %vm454, %vm455
    %v457 = vsel %vm456, %v449, %v453
    %v458 = vand.u32 2147483647, %v448
    %vm459 = vcmp.eq.f32.partialorder %v458, 8.507059e+37
    %v460 = vand.u32 %v448, 2147483648
    %v461 = vor.u32 1.1754944e-38, %v460
    %v462 = vsel %vm459, %v461, %v457
    %v463 = vmul.f32 1.0, %v462
    %v464 = vtanh.pop %v444
    %v465 = vsel %vm47, %v464, %v463
    %v466 = vmul.f32 %v465, %v407
    %468 = vrot.lane.b32.xlu0 %v465, 64
    %v469 = vpop.permute.xlu0 %468
    %v471 = vmul.f32 %v465, %v469
    %473 = vrot.lane.b32.xlu0 %v471, 32
    %v474 = vpop.permute.xlu0 %473
    %v476 = vadd.f32 %v466, %v474
    %v477 = vtanh.pop %v476
    %479 = vrot.lane.b32.xlu0 %v477, 64
    %v480 = vpop.permute.xlu0 %479
    %v482 = vmul.f32 %v465, %v480
    %484 = vrot.lane.b32.xlu0 %v482, 32
    %v485 = vpop.permute.xlu0 %484
    %s487 = scalar_lea.vmem [#allocation3], 32
    %488 = vst.msk [vmem:[%s487] sm:$0xff] %vm145, %v485
    %s489 = scalar_lea.vmem [#allocation2], 40
    %v490 = vld [vmem:[%s489] sm:$0xff]
    %v491 = vsel %vm145, %v485, 0
    %493 = vmatpush.msra.mxu0 0.0
    %494 = vmatpush.msra.mxu0 0.0
    %495 = vmatpush.msra.mxu0 0.0
    %496 = vmatpush.msra.mxu0 0.0
    %497 = vmatpush.msra.mxu0 0.0
    %498 = vmatpush.msra.mxu0 0.0
    %499 = vmatpush.msra.mxu0 0.0
    %500 = vmatpush.msra.mxu0 0.0
    %501 = vmatpush.msra.mxu0 0.0
    %502 = vmatpush.msra.mxu0 0.0
    %503 = vmatpush.msra.mxu0 0.0
    %504 = vmatpush.msra.mxu0 0.0
    %505 = vmatpush.msra.mxu0 %v143
    %506 = vmatpush.msra.mxu0 %v142
    %507 = vmatpush.msra.mxu0 %v141
    %508 = vmatpush.msra.mxu0 %v140
    %509 = vmatmul.f32.gmra.mxu0 %v491
    %v510 = vpop.f32.mrf.mxu0
    %v511 = vadd.f32 0.0, %v510
    %512 = vdwg.mxu0
    %v513 = vadd.f32 %v490, %v511
    %v514 = vxor.u32 %v513, 2147483648
    %v515 = vmul.f32 %v514, 1.442695
    %v516 = vpow.pop %v515
    %v517 = vadd.f32 %v516, 1.0
    %v518 = vrcp.pop %v517
    %v519 = vmul.f32 %v517, %v518
    %v520 = vsub.f32 1.0, %v519
    %v521 = vmul.f32 %v518, %v520
    %v522 = vadd.f32 %v518, %v521
    %vm523 = vweird.f32 %v517
    %vm524 = vweird.f32 %v518
    %vm525 = vmor %vm523, %vm524
    %v526 = vsel %vm525, %v518, %v522
    %v527 = vand.u32 2147483647, %v517
    %vm528 = vcmp.eq.f32.partialorder %v527, 8.507059e+37
    %v529 = vand.u32 %v517, 2147483648
    %v530 = vor.u32 1.1754944e-38, %v529
    %v531 = vsel %vm528, %v530, %v526
    %v532 = vmul.f32 1.0, %v531
    %v533 = vtanh.pop %v513
    %v534 = vsel %vm47, %v533, %v532
    %v535 = vmul.f32 %v534, %v476
    %537 = vrot.lane.b32.xlu0 %v534, 64
    %v538 = vpop.permute.xlu0 %537
    %v540 = vmul.f32 %v534, %v538
    %542 = vrot.lane.b32.xlu0 %v540, 32
    %v543 = vpop.permute.xlu0 %542
    %v545 = vadd.f32 %v535, %v543
    %v546 = vtanh.pop %v545
    %548 = vrot.lane.b32.xlu0 %v546, 64
    %v549 = vpop.permute.xlu0 %548
    %v551 = vmul.f32 %v534, %v549
    %553 = vrot.lane.b32.xlu0 %v551, 32
    %v554 = vpop.permute.xlu0 %553
    %s556 = scalar_lea.vmem [#allocation3], 40
    %557 = vst.msk [vmem:[%s556] sm:$0xff] %vm145, %v554
    %s558 = scalar_lea.vmem [#allocation2], 48
    %v559 = vld [vmem:[%s558] sm:$0xff]
    %v560 = vsel %vm145, %v554, 0
    %562 = vmatpush.msra.mxu0 0.0
    %563 = vmatpush.msra.mxu0 0.0
    %564 = vmatpush.msra.mxu0 0.0
    %565 = vmatpush.msra.mxu0 0.0
    %566 = vmatpush.msra.mxu0 0.0
    %567 = vmatpush.msra.mxu0 0.0
    %568 = vmatpush.msra.mxu0 0.0
    %569 = vmatpush.msra.mxu0 0.0
    %570 = vmatpush.msra.mxu0 0.0
    %571 = vmatpush.msra.mxu0 0.0
    %572 = vmatpush.msra.mxu0 0.0
    %573 = vmatpush.msra.mxu0 0.0
    %574 = vmatpush.msra.mxu0 %v143
    %575 = vmatpush.msra.mxu0 %v142
    %576 = vmatpush.msra.mxu0 %v141
    %577 = vmatpush.msra.mxu0 %v140
    %578 = vmatmul.f32.gmra.mxu0 %v560
    %v579 = vpop.f32.mrf.mxu0
    %v580 = vadd.f32 0.0, %v579
    %581 = vdwg.mxu0
    %v582 = vadd.f32 %v559, %v580
    %v583 = vxor.u32 %v582, 2147483648
    %v584 = vmul.f32 %v583, 1.442695
    %v585 = vpow.pop %v584
    %v586 = vadd.f32 %v585, 1.0
    %v587 = vrcp.pop %v586
    %v588 = vmul.f32 %v586, %v587
    %v589 = vsub.f32 1.0, %v588
    %v590 = vmul.f32 %v587, %v589
    %v591 = vadd.f32 %v587, %v590
    %vm592 = vweird.f32 %v586
    %vm593 = vweird.f32 %v587
    %vm594 = vmor %vm592, %vm593
    %v595 = vsel %vm594, %v587, %v591
    %v596 = vand.u32 2147483647, %v586
    %vm597 = vcmp.eq.f32.partialorder %v596, 8.507059e+37
    %v598 = vand.u32 %v586, 2147483648
    %v599 = vor.u32 1.1754944e-38, %v598
    %v600 = vsel %vm597, %v599, %v595
    %v601 = vmul.f32 1.0, %v600
    %v602 = vtanh.pop %v582
    %v603 = vsel %vm47, %v602, %v601
    %v604 = vmul.f32 %v603, %v545
    %606 = vrot.lane.b32.xlu0 %v603, 64
    %v607 = vpop.permute.xlu0 %606
    %v609 = vmul.f32 %v603, %v607
    %611 = vrot.lane.b32.xlu0 %v609, 32
    %v612 = vpop.permute.xlu0 %611
    %v614 = vadd.f32 %v604, %v612
    %v615 = vtanh.pop %v614
    %617 = vrot.lane.b32.xlu0 %v615, 64
    %v618 = vpop.permute.xlu0 %617
    %v620 = vmul.f32 %v603, %v618
    %622 = vrot.lane.b32.xlu0 %v620, 32
    %v623 = vpop.permute.xlu0 %622
    %s625 = scalar_lea.vmem [#allocation3], 48
    %626 = vst.msk [vmem:[%s625] sm:$0xff] %vm145, %v623
    %s627 = scalar_lea.vmem [#allocation2], 56
    %v628 = vld [vmem:[%s627] sm:$0xff]
    %v629 = vsel %vm145, %v623, 0
    %631 = vmatpush.msra.mxu0 0.0
    %632 = vmatpush.msra.mxu0 0.0
    %633 = vmatpush.msra.mxu0 0.0
    %634 = vmatpush.msra.mxu0 0.0
    %635 = vmatpush.msra.mxu0 0.0
    %636 = vmatpush.msra.mxu0 0.0
    %637 = vmatpush.msra.mxu0 0.0
    %638 = vmatpush.msra.mxu0 0.0
    %639 = vmatpush.msra.mxu0 0.0
    %640 = vmatpush.msra.mxu0 0.0
    %641 = vmatpush.msra.mxu0 0.0
    %642 = vmatpush.msra.mxu0 0.0
    %643 = vmatpush.msra.mxu0 %v143
    %644 = vmatpush.msra.mxu0 %v142
    %645 = vmatpush.msra.mxu0 %v141
    %646 = vmatpush.msra.mxu0 %v140
    %647 = vmatmul.f32.gmra.mxu0 %v629
    %v648 = vpop.f32.mrf.mxu0
    %v649 = vadd.f32 0.0, %v648
    %650 = vdwg.mxu0
    %v651 = vadd.f32 %v628, %v649
    %v652 = vxor.u32 %v651, 2147483648
    %v653 = vmul.f32 %v652, 1.442695
    %v654 = vpow.pop %v653
    %v655 = vadd.f32 %v654, 1.0
    %v656 = vrcp.pop %v655
    %v657 = vmul.f32 %v655, %v656
    %v658 = vsub.f32 1.0, %v657
    %v659 = vmul.f32 %v656, %v658
    %v660 = vadd.f32 %v656, %v659
    %vm661 = vweird.f32 %v655
    %vm662 = vweird.f32 %v656
    %vm663 = vmor %vm661, %vm662
    %v664 = vsel %vm663, %v656, %v660
    %v665 = vand.u32 2147483647, %v655
    %vm666 = vcmp.eq.f32.partialorder %v665, 8.507059e+37
    %v667 = vand.u32 %v655, 2147483648
    %v668 = vor.u32 1.1754944e-38, %v667
    %v669 = vsel %vm666, %v668, %v664
    %v670 = vmul.f32 1.0, %v669
    %v671 = vtanh.pop %v651
    %v672 = vsel %vm47, %v671, %v670
    %v673 = vmul.f32 %v672, %v614
    %675 = vrot.lane.b32.xlu0 %v672, 64
    %v676 = vpop.permute.xlu0 %675
    %v678 = vmul.f32 %v672, %v676
    %680 = vrot.lane.b32.xlu0 %v678, 32
    %v681 = vpop.permute.xlu0 %680
    %v683 = vadd.f32 %v673, %v681
    %v684 = vtanh.pop %v683
    %686 = vrot.lane.b32.xlu0 %v684, 64
    %v687 = vpop.permute.xlu0 %686
    %v689 = vmul.f32 %v672, %v687
    %691 = vrot.lane.b32.xlu0 %v689, 32
    %v692 = vpop.permute.xlu0 %691
    %s694 = scalar_lea.vmem [#allocation3], 56
    %695 = vst.msk [vmem:[%s694] sm:$0xff] %vm145, %v692
    %v696 = vld [vmem:[#allocation3] sm:$0xff]
    %v697 = vld [vmem:[#allocation3 + $0x8] sm:$0xff]
    %v698 = vld [vmem:[#allocation3 + $0x10] sm:$0xff]
    %v699 = vld [vmem:[#allocation3 + $0x18] sm:$0xff]
    %v700 = vld [vmem:[#allocation3 + $0x20] sm:$0xff]
    %v701 = vld [vmem:[#allocation3 + $0x28] sm:$0xff]
    %v702 = vld [vmem:[#allocation3 + $0x30] sm:$0xff]
    %v703 = vld [vmem:[#allocation3 + $0x38] sm:$0xff]
    %v704 = vld [vmem:[%s4] sm:$0xff]
    %v705 = vld [vmem:[%s4 + $0x8] sm:$0xff]
    %v706 = vld [vmem:[%s4 + $0x10] sm:$0xff]
    %v707 = vld [vmem:[%s4 + $0x18] sm:$0xff]
    %v708 = vld [vmem:[%s6] sm:$0x1]
    %v710 = vperm.slane %v708, 0
    %v713 = vsel %vm145, %v696, 0
    %v716 = vsel %vm145, %v697, 0
    %v719 = vsel %vm145, %v698, 0
    %v722 = vsel %vm145, %v699, 0
    %v725 = vsel %vm145, %v700, 0
    %v728 = vsel %vm145, %v701, 0
    %v731 = vsel %vm145, %v702, 0
    %v734 = vsel %vm145, %v703, 0
    %736 = vmatpush.msra.mxu0 0.0
    %737 = vmatpush.msra.mxu0 0.0
    %738 = vmatpush.msra.mxu0 0.0
    %739 = vmatpush.msra.mxu0 0.0
    %740 = vmatpush.msra.mxu0 0.0
    %741 = vmatpush.msra.mxu0 0.0
    %742 = vmatpush.msra.mxu0 0.0
    %743 = vmatpush.msra.mxu0 0.0
    %744 = vmatpush.msra.mxu0 0.0
    %745 = vmatpush.msra.mxu0 0.0
    %746 = vmatpush.msra.mxu0 0.0
    %747 = vmatpush.msra.mxu0 0.0
    %748 = vmatpush.msra.mxu0 %v707
    %749 = vmatpush.msra.mxu0 %v706
    %750 = vmatpush.msra.mxu0 %v705
    %751 = vmatpush.msra.mxu0 %v704
    %752 = vmatmul.f32.gmra.mxu0 %v713
    %v753 = vpop.f32.mrf.mxu0
    %v754 = vadd.f32 %v710, %v753
    %755 = vmatmul.f32.gmra.mxu0 %v716
    %v756 = vpop.f32.mrf.mxu0
    %v757 = vadd.f32 %v710, %v756
    %758 = vmatmul.f32.gmra.mxu0 %v719
    %v759 = vpop.f32.mrf.mxu0
    %v760 = vadd.f32 %v710, %v759
    %761 = vmatmul.f32.gmra.mxu0 %v722
    %v762 = vpop.f32.mrf.mxu0
    %v763 = vadd.f32 %v710, %v762
    %764 = vmatmul.f32.gmra.mxu0 %v725
    %v765 = vpop.f32.mrf.mxu0
    %v766 = vadd.f32 %v710, %v765
    %767 = vmatmul.f32.gmra.mxu0 %v728
    %v768 = vpop.f32.mrf.mxu0
    %v769 = vadd.f32 %v710, %v768
    %770 = vmatmul.f32.gmra.mxu0 %v731
    %v771 = vpop.f32.mrf.mxu0
    %v772 = vadd.f32 %v710, %v771
    %773 = vmatmul.f32.gmra.mxu0 %v734
    %v774 = vpop.f32.mrf.mxu0
    %v775 = vadd.f32 %v710, %v774
    %776 = vdwg.mxu0
    %777 = vst [vmem:[#allocation2] sm:$0xff] %v754
    %778 = vst [vmem:[#allocation2 + $0x8] sm:$0xff] %v757
    %779 = vst [vmem:[#allocation2 + $0x10] sm:$0xff] %v760
    %780 = vst [vmem:[#allocation2 + $0x18] sm:$0xff] %v763
    %781 = vst [vmem:[#allocation2 + $0x20] sm:$0xff] %v766
    %782 = vst [vmem:[#allocation2 + $0x28] sm:$0xff] %v769
    %783 = vst [vmem:[#allocation2 + $0x30] sm:$0xff] %v772
    %784 = vst [vmem:[#allocation2 + $0x38] sm:$0xff] %v775
    %v785 = vld [vmem:[#allocation4] sm:$0xff]
    %v786 = vld [vmem:[#allocation4 + $0x8] sm:$0xff]
    %v787 = vld [vmem:[#allocation4 + $0x10] sm:$0xff]
    %v788 = vld [vmem:[#allocation4 + $0x18] sm:$0xff]
    %v789 = vld [vmem:[#allocation2] sm:$0xff]
    %790 = vmatpush.msra.mxu0 0.0
    %791 = vmatpush.msra.mxu0 0.0
    %792 = vmatpush.msra.mxu0 0.0
    %793 = vmatpush.msra.mxu0 0.0
    %794 = vmatpush.msra.mxu0 0.0
    %795 = vmatpush.msra.mxu0 0.0
    %796 = vmatpush.msra.mxu0 0.0
    %797 = vmatpush.msra.mxu0 0.0
    %798 = vmatpush.msra.mxu0 0.0
    %799 = vmatpush.msra.mxu0 0.0
    %800 = vmatpush.msra.mxu0 0.0
    %801 = vmatpush.msra.mxu0 0.0
    %802 = vmatpush.msra.mxu0 %v788
    %803 = vmatpush.msra.mxu0 %v787
    %804 = vmatpush.msra.mxu0 %v786
    %805 = vmatpush.msra.mxu0 %v785
    %806 = vmatmul.f32.gmra.mxu0 %v147
    %v807 = vpop.f32.mrf.mxu0
    %v808 = vadd.f32 0.0, %v807
    %809 = vdwg.mxu0
    %v810 = vadd.f32 %v789, %v808
    %v811 = vxor.u32 %v810, 2147483648
    %v812 = vmul.f32 %v811, 1.442695
    %v813 = vpow.pop %v812
    %v814 = vadd.f32 %v813, 1.0
    %v815 = vrcp.pop %v814
    %v816 = vmul.f32 %v814, %v815
    %v817 = vsub.f32 1.0, %v816
    %v818 = vmul.f32 %v815, %v817
    %v819 = vadd.f32 %v815, %v818
    %vm820 = vweird.f32 %v814
    %vm821 = vweird.f32 %v815
    %vm822 = vmor %vm820, %vm821
    %v823 = vsel %vm822, %v815, %v819
    %v824 = vand.u32 2147483647, %v814
    %vm825 = vcmp.eq.f32.partialorder %v824, 8.507059e+37
    %v826 = vand.u32 %v814, 2147483648
    %v827 = vor.u32 1.1754944e-38, %v826
    %v828 = vsel %vm825, %v827, %v823
    %v829 = vmul.f32 1.0, %v828
    %v830 = vtanh.pop %v810
    %v831 = vsel %vm47, %v830, %v829
    %v832 = vmul.f32 %v831, 0.0
    %834 = vrot.lane.b32.xlu0 %v831, 64
    %v835 = vpop.permute.xlu0 %834
    %v837 = vmul.f32 %v831, %v835
    %839 = vrot.lane.b32.xlu0 %v837, 32
    %v840 = vpop.permute.xlu0 %839
    %v842 = vadd.f32 %v832, %v840
    %v843 = vtanh.pop %v842
    %845 = vrot.lane.b32.xlu0 %v843, 64
    %v846 = vpop.permute.xlu0 %845
    %v848 = vmul.f32 %v831, %v846
    %850 = vrot.lane.b32.xlu0 %v848, 32
    %v851 = vpop.permute.xlu0 %850
    %853 = vst.msk [vmem:[#allocation7] sm:$0xff] %vm145, %v851
    %v854 = vld [vmem:[%s213] sm:$0xff]
    %v855 = vsel %vm145, %v851, 0
    %857 = vmatpush.msra.mxu0 0.0
    %858 = vmatpush.msra.mxu0 0.0
    %859 = vmatpush.msra.mxu0 0.0
    %860 = vmatpush.msra.mxu0 0.0
    %861 = vmatpush.msra.mxu0 0.0
    %862 = vmatpush.msra.mxu0 0.0
    %863 = vmatpush.msra.mxu0 0.0
    %864 = vmatpush.msra.mxu0 0.0
    %865 = vmatpush.msra.mxu0 0.0
    %866 = vmatpush.msra.mxu0 0.0
    %867 = vmatpush.msra.mxu0 0.0
    %868 = vmatpush.msra.mxu0 0.0
    %869 = vmatpush.msra.mxu0 %v788
    %870 = vmatpush.msra.mxu0 %v787
    %871 = vmatpush.msra.mxu0 %v786
    %872 = vmatpush.msra.mxu0 %v785
    %873 = vmatmul.f32.gmra.mxu0 %v855
    %v874 = vpop.f32.mrf.mxu0
    %v875 = vadd.f32 0.0, %v874
    %876 = vdwg.mxu0
    %v877 = vadd.f32 %v854, %v875
    %v878 = vxor.u32 %v877, 2147483648
    %v879 = vmul.f32 %v878, 1.442695
    %v880 = vpow.pop %v879
    %v881 = vadd.f32 %v880, 1.0
    %v882 = vrcp.pop %v881
    %v883 = vmul.f32 %v881, %v882
    %v884 = vsub.f32 1.0, %v883
    %v885 = vmul.f32 %v882, %v884
    %v886 = vadd.f32 %v882, %v885
    %vm887 = vweird.f32 %v881
    %vm888 = vweird.f32 %v882
    %vm889 = vmor %vm887, %vm888
    %v890 = vsel %vm889, %v882, %v886
    %v891 = vand.u32 2147483647, %v881
    %vm892 = vcmp.eq.f32.partialorder %v891, 8.507059e+37
    %v893 = vand.u32 %v881, 2147483648
    %v894 = vor.u32 1.1754944e-38, %v893
    %v895 = vsel %vm892, %v894, %v890
    %v896 = vmul.f32 1.0, %v895
    %v897 = vtanh.pop %v877
    %v898 = vsel %vm47, %v897, %v896
    %v899 = vmul.f32 %v898, %v842
    %901 = vrot.lane.b32.xlu0 %v898, 64
    %v902 = vpop.permute.xlu0 %901
    %v904 = vmul.f32 %v898, %v902
    %906 = vrot.lane.b32.xlu0 %v904, 32
    %v907 = vpop.permute.xlu0 %906
    %v909 = vadd.f32 %v899, %v907
    %v910 = vtanh.pop %v909
    %912 = vrot.lane.b32.xlu0 %v910, 64
    %v913 = vpop.permute.xlu0 %912
    %v915 = vmul.f32 %v898, %v913
    %917 = vrot.lane.b32.xlu0 %v915, 32
    %v918 = vpop.permute.xlu0 %917
    %s920 = scalar_lea.vmem [#allocation7], 8
    %921 = vst.msk [vmem:[%s920] sm:$0xff] %vm145, %v918
    %v922 = vld [vmem:[%s282] sm:$0xff]
    %v923 = vsel %vm145, %v918, 0
    %925 = vmatpush.msra.mxu0 0.0
    %926 = vmatpush.msra.mxu0 0.0
    %927 = vmatpush.msra.mxu0 0.0
    %928 = vmatpush.msra.mxu0 0.0
    %929 = vmatpush.msra.mxu0 0.0
    %930 = vmatpush.msra.mxu0 0.0
    %931 = vmatpush.msra.mxu0 0.0
    %932 = vmatpush.msra.mxu0 0.0
    %933 = vmatpush.msra.mxu0 0.0
    %934 = vmatpush.msra.mxu0 0.0
    %935 = vmatpush.msra.mxu0 0.0
    %936 = vmatpush.msra.mxu0 0.0
    %937 = vmatpush.msra.mxu0 %v788
    %938 = vmatpush.msra.mxu0 %v787
    %939 = vmatpush.msra.mxu0 %v786
    %940 = vmatpush.msra.mxu0 %v785
    %941 = vmatmul.f32.gmra.mxu0 %v923
    %v942 = vpop.f32.mrf.mxu0
    %v943 = vadd.f32 0.0, %v942
    %944 = vdwg.mxu0
    %v945 = vadd.f32 %v922, %v943
    %v946 = vxor.u32 %v945, 2147483648
    %v947 = vmul.f32 %v946, 1.442695
    %v948 = vpow.pop %v947
    %v949 = vadd.f32 %v948, 1.0
    %v950 = vrcp.pop %v949
    %v951 = vmul.f32 %v949, %v950
    %v952 = vsub.f32 1.0, %v951
    %v953 = vmul.f32 %v950, %v952
    %v954 = vadd.f32 %v950, %v953
    %vm955 = vweird.f32 %v949
    %vm956 = vweird.f32 %v950
    %vm957 = vmor %vm955, %vm956
    %v958 = vsel %vm957, %v950, %v954
    %v959 = vand.u32 2147483647, %v949
    %vm960 = vcmp.eq.f32.partialorder %v959, 8.507059e+37
    %v961 = vand.u32 %v949, 2147483648
    %v962 = vor.u32 1.1754944e-38, %v961
    %v963 = vsel %vm960, %v962, %v958
    %v964 = vmul.f32 1.0, %v963
    %v965 = vtanh.pop %v945
    %v966 = vsel %vm47, %v965, %v964
    %v967 = vmul.f32 %v966, %v909
    %969 = vrot.lane.b32.xlu0 %v966, 64
    %v970 = vpop.permute.xlu0 %969
    %v972 = vmul.f32 %v966, %v970
    %974 = vrot.lane.b32.xlu0 %v972, 32
    %v975 = vpop.permute.xlu0 %974
    %v977 = vadd.f32 %v967, %v975
    %v978 = vtanh.pop %v977
    %980 = vrot.lane.b32.xlu0 %v978, 64
    %v981 = vpop.permute.xlu0 %980
    %v983 = vmul.f32 %v966, %v981
    %985 = vrot.lane.b32.xlu0 %v983, 32
    %v986 = vpop.permute.xlu0 %985
    %s988 = scalar_lea.vmem [#allocation7], 16
    %989 = vst.msk [vmem:[%s988] sm:$0xff] %vm145, %v986
    %v990 = vld [vmem:[%s351] sm:$0xff]
    %v991 = vsel %vm145, %v986, 0
    %993 = vmatpush.msra.mxu0 0.0
    %994 = vmatpush.msra.mxu0 0.0
    %995 = vmatpush.msra.mxu0 0.0
    %996 = vmatpush.msra.mxu0 0.0
    %997 = vmatpush.msra.mxu0 0.0
    %998 = vmatpush.msra.mxu0 0.0
    %999 = vmatpush.msra.mxu0 0.0
    %1000 = vmatpush.msra.mxu0 0.0
    %1001 = vmatpush.msra.mxu0 0.0
    %1002 = vmatpush.msra.mxu0 0.0
    %1003 = vmatpush.msra.mxu0 0.0
    %1004 = vmatpush.msra.mxu0 0.0
    %1005 = vmatpush.msra.mxu0 %v788
    %1006 = vmatpush.msra.mxu0 %v787
    %1007 = vmatpush.msra.mxu0 %v786
    %1008 = vmatpush.msra.mxu0 %v785
    %1009 = vmatmul.f32.gmra.mxu0 %v991
    %v1010 = vpop.f32.mrf.mxu0
    %v1011 = vadd.f32 0.0, %v1010
    %1012 = vdwg.mxu0
    %v1013 = vadd.f32 %v990, %v1011
    %v1014 = vxor.u32 %v1013, 2147483648
    %v1015 = vmul.f32 %v1014, 1.442695
    %v1016 = vpow.pop %v1015
    %v1017 = vadd.f32 %v1016, 1.0
    %v1018 = vrcp.pop %v1017
    %v1019 = vmul.f32 %v1017, %v1018
    %v1020 = vsub.f32 1.0, %v1019
    %v1021 = vmul.f32 %v1018, %v1020
    %v1022 = vadd.f32 %v1018, %v1021
    %vm1023 = vweird.f32 %v1017
    %vm1024 = vweird.f32 %v1018
    %vm1025 = vmor %vm1023, %vm1024
    %v1026 = vsel %vm1025, %v1018, %v1022
    %v1027 = vand.u32 2147483647, %v1017
    %vm1028 = vcmp.eq.f32.partialorder %v1027, 8.507059e+37
    %v1029 = vand.u32 %v1017, 2147483648
    %v1030 = vor.u32 1.1754944e-38, %v1029
    %v1031 = vsel %vm1028, %v1030, %v1026
    %v1032 = vmul.f32 1.0, %v1031
    %v1033 = vtanh.pop %v1013
    %v1034 = vsel %vm47, %v1033, %v1032
    %v1035 = vmul.f32 %v1034, %v977
    %1037 = vrot.lane.b32.xlu0 %v1034, 64
    %v1038 = vpop.permute.xlu0 %1037
    %v1040 = vmul.f32 %v1034, %v1038
    %1042 = vrot.lane.b32.xlu0 %v1040, 32
    %v1043 = vpop.permute.xlu0 %1042
    %v1045 = vadd.f32 %v1035, %v1043
    %v1046 = vtanh.pop %v1045
    %1048 = vrot.lane.b32.xlu0 %v1046, 64
    %v1049 = vpop.permute.xlu0 %1048
    %v1051 = vmul.f32 %v1034, %v1049
    %1053 = vrot.lane.b32.xlu0 %v1051, 32
    %v1054 = vpop.permute.xlu0 %1053
    %s1056 = scalar_lea.vmem [#allocation7], 24
    %1057 = vst.msk [vmem:[%s1056] sm:$0xff] %vm145, %v1054
    %v1058 = vld [vmem:[%s420] sm:$0xff]
    %v1059 = vsel %vm145, %v1054, 0
    %1061 = vmatpush.msra.mxu0 0.0
    %1062 = vmatpush.msra.mxu0 0.0
    %1063 = vmatpush.msra.mxu0 0.0
    %1064 = vmatpush.msra.mxu0 0.0
    %1065 = vmatpush.msra.mxu0 0.0
    %1066 = vmatpush.msra.mxu0 0.0
    %1067 = vmatpush.msra.mxu0 0.0
    %1068 = vmatpush.msra.mxu0 0.0
    %1069 = vmatpush.msra.mxu0 0.0
    %1070 = vmatpush.msra.mxu0 0.0
    %1071 = vmatpush.msra.mxu0 0.0
    %1072 = vmatpush.msra.mxu0 0.0
    %1073 = vmatpush.msra.mxu0 %v788
    %1074 = vmatpush.msra.mxu0 %v787
    %1075 = vmatpush.msra.mxu0 %v786
    %1076 = vmatpush.msra.mxu0 %v785
    %1077 = vmatmul.f32.gmra.mxu0 %v1059
    %v1078 = vpop.f32.mrf.mxu0
    %v1079 = vadd.f32 0.0, %v1078
    %1080 = vdwg.mxu0
    %v1081 = vadd.f32 %v1058, %v1079
    %v1082 = vxor.u32 %v1081, 2147483648
    %v1083 = vmul.f32 %v1082, 1.442695
    %v1084 = vpow.pop %v1083
    %v1085 = vadd.f32 %v1084, 1.0
    %v1086 = vrcp.pop %v1085
    %v1087 = vmul.f32 %v1085, %v1086
    %v1088 = vsub.f32 1.0, %v1087
    %v1089 = vmul.f32 %v1086, %v1088
    %v1090 = vadd.f32 %v1086, %v1089
    %vm1091 = vweird.f32 %v1085
    %vm1092 = vweird.f32 %v1086
    %vm1093 = vmor %vm1091, %vm1092
    %v1094 = vsel %vm1093, %v1086, %v1090
    %v1095 = vand.u32 2147483647, %v1085
    %vm1096 = vcmp.eq.f32.partialorder %v1095, 8.507059e+37
    %v1097 = vand.u32 %v1085, 2147483648
    %v1098 = vor.u32 1.1754944e-38, %v1097
    %v1099 = vsel %vm1096, %v1098, %v1094
    %v1100 = vmul.f32 1.0, %v1099
    %v1101 = vtanh.pop %v1081
    %v1102 = vsel %vm47, %v1101, %v1100
    %v1103 = vmul.f32 %v1102, %v1045
    %1105 = vrot.lane.b32.xlu0 %v1102, 64
    %v1106 = vpop.permute.xlu0 %1105
    %v1108 = vmul.f32 %v1102, %v1106
    %1110 = vrot.lane.b32.xlu0 %v1108, 32
    %v1111 = vpop.permute.xlu0 %1110
    %v1113 = vadd.f32 %v1103, %v1111
    %v1114 = vtanh.pop %v1113
    %1116 = vrot.lane.b32.xlu0 %v1114, 64
    %v1117 = vpop.permute.xlu0 %1116
    %v1119 = vmul.f32 %v1102, %v1117
    %1121 = vrot.lane.b32.xlu0 %v1119, 32
    %v1122 = vpop.permute.xlu0 %1121
    %s1124 = scalar_lea.vmem [#allocation7], 32
    %1125 = vst.msk [vmem:[%s1124] sm:$0xff] %vm145, %v1122
    %v1126 = vld [vmem:[%s489] sm:$0xff]
    %v1127 = vsel %vm145, %v1122, 0
    %1129 = vmatpush.msra.mxu0 0.0
    %1130 = vmatpush.msra.mxu0 0.0
    %1131 = vmatpush.msra.mxu0 0.0
    %1132 = vmatpush.msra.mxu0 0.0
    %1133 = vmatpush.msra.mxu0 0.0
    %1134 = vmatpush.msra.mxu0 0.0
    %1135 = vmatpush.msra.mxu0 0.0
    %1136 = vmatpush.msra.mxu0 0.0
    %1137 = vmatpush.msra.mxu0 0.0
    %1138 = vmatpush.msra.mxu0 0.0
    %1139 = vmatpush.msra.mxu0 0.0
    %1140 = vmatpush.msra.mxu0 0.0
    %1141 = vmatpush.msra.mxu0 %v788
    %1142 = vmatpush.msra.mxu0 %v787
    %1143 = vmatpush.msra.mxu0 %v786
    %1144 = vmatpush.msra.mxu0 %v785
    %1145 = vmatmul.f32.gmra.mxu0 %v1127
    %v1146 = vpop.f32.mrf.mxu0
    %v1147 = vadd.f32 0.0, %v1146
    %1148 = vdwg.mxu0
    %v1149 = vadd.f32 %v1126, %v1147
    %v1150 = vxor.u32 %v1149, 2147483648
    %v1151 = vmul.f32 %v1150, 1.442695
    %v1152 = vpow.pop %v1151
    %v1153 = vadd.f32 %v1152, 1.0
    %v1154 = vrcp.pop %v1153
    %v1155 = vmul.f32 %v1153, %v1154
    %v1156 = vsub.f32 1.0, %v1155
    %v1157 = vmul.f32 %v1154, %v1156
    %v1158 = vadd.f32 %v1154, %v1157
    %vm1159 = vweird.f32 %v1153
    %vm1160 = vweird.f32 %v1154
    %vm1161 = vmor %vm1159, %vm1160
    %v1162 = vsel %vm1161, %v1154, %v1158
    %v1163 = vand.u32 2147483647, %v1153
    %vm1164 = vcmp.eq.f32.partialorder %v1163, 8.507059e+37
    %v1165 = vand.u32 %v1153, 2147483648
    %v1166 = vor.u32 1.1754944e-38, %v1165
    %v1167 = vsel %vm1164, %v1166, %v1162
    %v1168 = vmul.f32 1.0, %v1167
    %v1169 = vtanh.pop %v1149
    %v1170 = vsel %vm47, %v1169, %v1168
    %v1171 = vmul.f32 %v1170, %v1113
    %1173 = vrot.lane.b32.xlu0 %v1170, 64
    %v1174 = vpop.permute.xlu0 %1173
    %v1176 = vmul.f32 %v1170, %v1174
    %1178 = vrot.lane.b32.xlu0 %v1176, 32
    %v1179 = vpop.permute.xlu0 %1178
    %v1181 = vadd.f32 %v1171, %v1179
    %v1182 = vtanh.pop %v1181
    %1184 = vrot.lane.b32.xlu0 %v1182, 64
    %v1185 = vpop.permute.xlu0 %1184
    %v1187 = vmul.f32 %v1170, %v1185
    %1189 = vrot.lane.b32.xlu0 %v1187, 32
    %v1190 = vpop.permute.xlu0 %1189
    %s1192 = scalar_lea.vmem [#allocation7], 40
    %1193 = vst.msk [vmem:[%s1192] sm:$0xff] %vm145, %v1190
    %v1194 = vld [vmem:[%s558] sm:$0xff]
    %v1195 = vsel %vm145, %v1190, 0
    %1197 = vmatpush.msra.mxu0 0.0
    %1198 = vmatpush.msra.mxu0 0.0
    %1199 = vmatpush.msra.mxu0 0.0
    %1200 = vmatpush.msra.mxu0 0.0
    %1201 = vmatpush.msra.mxu0 0.0
    %1202 = vmatpush.msra.mxu0 0.0
    %1203 = vmatpush.msra.mxu0 0.0
    %1204 = vmatpush.msra.mxu0 0.0
    %1205 = vmatpush.msra.mxu0 0.0
    %1206 = vmatpush.msra.mxu0 0.0
    %1207 = vmatpush.msra.mxu0 0.0
    %1208 = vmatpush.msra.mxu0 0.0
    %1209 = vmatpush.msra.mxu0 %v788
    %1210 = vmatpush.msra.mxu0 %v787
    %1211 = vmatpush.msra.mxu0 %v786
    %1212 = vmatpush.msra.mxu0 %v785
    %1213 = vmatmul.f32.gmra.mxu0 %v1195
    %v1214 = vpop.f32.mrf.mxu0
    %v1215 = vadd.f32 0.0, %v1214
    %1216 = vdwg.mxu0
    %v1217 = vadd.f32 %v1194, %v1215
    %v1218 = vxor.u32 %v1217, 2147483648
    %v1219 = vmul.f32 %v1218, 1.442695
    %v1220 = vpow.pop %v1219
    %v1221 = vadd.f32 %v1220, 1.0
    %v1222 = vrcp.pop %v1221
    %v1223 = vmul.f32 %v1221, %v1222
    %v1224 = vsub.f32 1.0, %v1223
    %v1225 = vmul.f32 %v1222, %v1224
    %v1226 = vadd.f32 %v1222, %v1225
    %vm1227 = vweird.f32 %v1221
    %vm1228 = vweird.f32 %v1222
    %vm1229 = vmor %vm1227, %vm1228
    %v1230 = vsel %vm1229, %v1222, %v1226
    %v1231 = vand.u32 2147483647, %v1221
    %vm1232 = vcmp.eq.f32.partialorder %v1231, 8.507059e+37
    %v1233 = vand.u32 %v1221, 2147483648
    %v1234 = vor.u32 1.1754944e-38, %v1233
    %v1235 = vsel %vm1232, %v1234, %v1230
    %v1236 = vmul.f32 1.0, %v1235
    %v1237 = vtanh.pop %v1217
    %v1238 = vsel %vm47, %v1237, %v1236
    %v1239 = vmul.f32 %v1238, %v1181
    %1241 = vrot.lane.b32.xlu0 %v1238, 64
    %v1242 = vpop.permute.xlu0 %1241
    %v1244 = vmul.f32 %v1238, %v1242
    %1246 = vrot.lane.b32.xlu0 %v1244, 32
    %v1247 = vpop.permute.xlu0 %1246
    %v1249 = vadd.f32 %v1239, %v1247
    %v1250 = vtanh.pop %v1249
    %1252 = vrot.lane.b32.xlu0 %v1250, 64
    %v1253 = vpop.permute.xlu0 %1252
    %v1255 = vmul.f32 %v1238, %v1253
    %1257 = vrot.lane.b32.xlu0 %v1255, 32
    %v1258 = vpop.permute.xlu0 %1257
    %s1260 = scalar_lea.vmem [#allocation7], 48
    %1261 = vst.msk [vmem:[%s1260] sm:$0xff] %vm145, %v1258
    %v1262 = vld [vmem:[%s627] sm:$0xff]
    %v1263 = vsel %vm145, %v1258, 0
    %1265 = vmatpush.msra.mxu0 0.0
    %1266 = vmatpush.msra.mxu0 0.0
    %1267 = vmatpush.msra.mxu0 0.0
    %1268 = vmatpush.msra.mxu0 0.0
    %1269 = vmatpush.msra.mxu0 0.0
    %1270 = vmatpush.msra.mxu0 0.0
    %1271 = vmatpush.msra.mxu0 0.0
    %1272 = vmatpush.msra.mxu0 0.0
    %1273 = vmatpush.msra.mxu0 0.0
    %1274 = vmatpush.msra.mxu0 0.0
    %1275 = vmatpush.msra.mxu0 0.0
    %1276 = vmatpush.msra.mxu0 0.0
    %1277 = vmatpush.msra.mxu0 %v788
    %1278 = vmatpush.msra.mxu0 %v787
    %1279 = vmatpush.msra.mxu0 %v786
    %1280 = vmatpush.msra.mxu0 %v785
    %1281 = vmatmul.f32.gmra.mxu0 %v1263
    %v1282 = vpop.f32.mrf.mxu0
    %v1283 = vadd.f32 0.0, %v1282
    %1284 = vdwg.mxu0
    %v1285 = vadd.f32 %v1262, %v1283
    %v1286 = vxor.u32 %v1285, 2147483648
    %v1287 = vmul.f32 %v1286, 1.442695
    %v1288 = vpow.pop %v1287
    %v1289 = vadd.f32 %v1288, 1.0
    %v1290 = vrcp.pop %v1289
    %v1291 = vmul.f32 %v1289, %v1290
    %v1292 = vsub.f32 1.0, %v1291
    %v1293 = vmul.f32 %v1290, %v1292
    %v1294 = vadd.f32 %v1290, %v1293
    %vm1295 = vweird.f32 %v1289
    %vm1296 = vweird.f32 %v1290
    %vm1297 = vmor %vm1295, %vm1296
    %v1298 = vsel %vm1297, %v1290, %v1294
    %v1299 = vand.u32 2147483647, %v1289
    %vm1300 = vcmp.eq.f32.partialorder %v1299, 8.507059e+37
    %v1301 = vand.u32 %v1289, 2147483648
    %v1302 = vor.u32 1.1754944e-38, %v1301
    %v1303 = vsel %vm1300, %v1302, %v1298
    %v1304 = vmul.f32 1.0, %v1303
    %v1305 = vtanh.pop %v1285
    %v1306 = vsel %vm47, %v1305, %v1304
    %v1307 = vmul.f32 %v1306, %v1249
    %1309 = vrot.lane.b32.xlu0 %v1306, 64
    %v1310 = vpop.permute.xlu0 %1309
    %v1312 = vmul.f32 %v1306, %v1310
    %1314 = vrot.lane.b32.xlu0 %v1312, 32
    %v1315 = vpop.permute.xlu0 %1314
    %v1317 = vadd.f32 %v1307, %v1315
    %v1318 = vtanh.pop %v1317
    %1320 = vrot.lane.b32.xlu0 %v1318, 64
    %v1321 = vpop.permute.xlu0 %1320
    %v1323 = vmul.f32 %v1306, %v1321
    %1325 = vrot.lane.b32.xlu0 %v1323, 32
    %v1326 = vpop.permute.xlu0 %1325
    %s1328 = scalar_lea.vmem [#allocation7], 56
    %1329 = vst.msk [vmem:[%s1328] sm:$0xff] %vm145, %v1326
    // Predicated region
    $region34: #{tpu_custom_call.1} parent=1 // pred_check
      _
    $region35: #{tpu_custom_call.1} parent=1 // pred_check_branch
      %1331 = sbr.rel (0) target = $region37
    $region36: #{tpu_custom_call.1} parent=1 // pred_region
      %1333 = vsyncadd [#allocation6], 0
      %s1334 = sshll.u32 [#allocation7], 4
      %s1335 = int_to_ptr.vmem [resolvable:$true] %s1334
      %s1336 = sshll.u32 %s7, 4
      %s1337 = int_to_ptr.hbm [resolvable:$true] %s1336
      %1342 = dma.vmem_to_hbm [thread:$0]  %s1335, 1024, %s1337, [#allocation6], 128, 128, 8
    $region37: #{tpu_custom_call.1} parent=1 // pred_fallthru
      _
    // Predicated region
    $region38: #{tpu_custom_call.1} parent=1 // pred_check
      _
    $region39: #{tpu_custom_call.1} parent=1 // pred_check_branch
      %1344 = sbr.rel (0) target = $region41
    $region40: #{tpu_custom_call.1} parent=1 // pred_region
      %1346 = dma.done [#allocation6], 1024
    $region41: #{tpu_custom_call.1} parent=1 // pred_fallthru
      _
    %1347 = vsyncpa [#allocation5], 1
    %1348 = vsyncpa [#allocation6], 1

</llo_original>
